<compile_context>
chip_gen: v6e
topology: v6e:2x2x1
jax: 0.10.0
libtpu: 0.0.40
codegen_flags: <defaults>
</compile_context>

<pallas_src>
import math

import jax
import jax.numpy as jnp
from jax import lax
from jax.experimental import pallas as pl
from jax.experimental.pallas import tpu as pltpu

# ---- module "parameters" (CenterNetBox3DDecoder.__init__ stores only these) ----
FEATURE_MAP_STRIDE = 4
VOXEL_SIZE = (0.1, 0.1, 0.15)
POINT_CLOUD_RANGE = (-51.2, -51.2, -5.0, 51.2, 51.2, 3.0)

# ---- problem sizes for the self-test (consistent with the forward signature) ----
NUM_CLASS = 3
H, W = 16, 16
K = 8                      # num_objs
NUM_ROT_CH = 24            # 12 heading bins + 12 residuals


def _num_tensorcores_per_device():
    """2 TensorCores per chip on v7x; 1 on v5e/v6e (and safe default)."""
    try:
        kind = jax.devices()[0].device_kind.lower()
    except Exception:
        return 1
    return 2 if ("7x" in kind or "v7" in kind or "tpu7" in kind) else 1


@jax.jit
def centernet_box3d_decode(hm, offset, height, dim, rot, inds):
    """NCHW head predictions + (B, K) int inds -> (box, cls, score)."""
    B, num_class, fh, fw = hm.shape
    n = fh * fw
    k = inds.shape[1]
    num_bins = rot.shape[1] // 2

    # channel layout of the gathered slab: hm | offset | height | dim | rot
    o_off = num_class
    o_hei = o_off + 2
    o_dim = o_hei + 1
    o_rot = o_dim + 3
    c_total = o_rot + 2 * num_bins            # 33 for the defaults
    c_out = 7 + num_class + 1                 # packed: box(7) | cls | score

    # Single channel-major slab per batch: contiguous NCHW reshapes + one tiny
    # XLA concat (~68 KB total here) -- far cheaper than the per-channel
    # in-kernel gather it replaces.  No f32 up-cast of the slab; the one-hot
    # matmul accumulates into f32 regardless of the head dtype.
    fdt = jnp.result_type(hm.dtype, offset.dtype, height.dtype,
                          dim.dtype, rot.dtype)
    feat = jnp.concatenate(
        [t.reshape(B, t.shape[1], n).astype(fdt)
         for t in (hm, offset, height, dim, rot)], axis=1)     # (B, C_total, N)
    inds = inds.astype(jnp.int32)

    sx = FEATURE_MAP_STRIDE * VOXEL_SIZE[0]
    sy = FEATURE_MAP_STRIDE * VOXEL_SIZE[1]
    px = POINT_CLOUD_RANGE[0]
    py = POINT_CLOUD_RANGE[1]
    angle_per_bin = 2.0 * math.pi / num_bins
    w_pow2 = (fw & (fw - 1)) == 0
    w_shift = fw.bit_length() - 1

    # Grid split: only dual-TC v7x benefits from a 2-way parallel batch split;
    # single-TC v5e/v6e run one grid step (no per-step pipeline overhead).
    gb = 2 if (_num_tensorcores_per_device() == 2
               and B >= 2 and B % 2 == 0) else 1
    bpb = B // gb

    def kernel(inds_ref, feat_ref, out_ref):
        # loop-invariant iotas hoisted out of the per-batch loop
        n_iota = lax.broadcasted_iota(jnp.int32, (k, n), 1)
        bin_iota = lax.broadcasted_iota(jnp.int32, (k, num_bins), 1)

        for bi in range(bpb):                                  # static unroll
            idx = inds_ref[bi, :]                              # (K,) int32

            # ---- gather (_transpose_and_gather_feat): ONE one-hot MXU matmul
            #      replaces 33 masked cross-lane reductions.  precision=HIGHEST
            #      keeps the f32 one-hot gather bit-exact. ----
            onehot = (n_iota == idx[:, None]).astype(fdt)      # (K, N)
            g = lax.dot_general(
                onehot, feat_ref[bi],
                dimension_numbers=(((1,), (1,)), ((), ())),    # (K,N)x(C,N)->(K,C)
                preferred_element_type=jnp.float32,
                precision=lax.Precision.HIGHEST)               # (K, C_total) f32

            # static lane slices of the gathered slab (no per-column concats)
            cls_logit = g[:, 0:num_class]                      # (K, C)
            off_x = g[:, o_off:o_off + 1]                      # (K, 1)
            off_y = g[:, o_off + 1:o_off + 2]
            hei_g = g[:, o_hei:o_hei + 1]
            dim_g = jnp.exp(g[:, o_dim:o_dim + 3])             # (K, 3)
            # TODO(synk): dim.exp() follows the pcdet log-dimension convention;
            # the truncated reference forward1 never assembles the box.
            rot_bin = g[:, o_rot:o_rot + num_bins]             # (K, bins)
            rot_res = g[:, o_rot + num_bins:o_rot + 2 * num_bins]

            # center: grid position (ind % W, ind // W) + offset -> world coords
            if w_pow2:                                         # strength-reduced %, //
                xs_i = idx & (fw - 1)
                ys_i = idx >> w_shift
            else:
                xs_i = idx % fw
                ys_i = idx // fw
            x = (xs_i.astype(jnp.float32)[:, None] + off_x) * sx + px
            y = (ys_i.astype(jnp.float32)[:, None] + off_y) * sy + py

            # decode_rot_binres: argmax bin (first max), gather its residual
            maxv = jnp.max(rot_bin, axis=-1, keepdims=True)
            bin_id = jnp.min(jnp.where(rot_bin == maxv, bin_iota, num_bins),
                             axis=-1, keepdims=True)           # (K, 1)
            res = jnp.sum(jnp.where(bin_iota == bin_id, rot_res, 0.0),
                          axis=-1, keepdims=True) * (angle_per_bin * 0.5)
            angle = bin_id.astype(jnp.float32) * angle_per_bin + res
            angle = jnp.where(angle > math.pi, angle - 2.0 * math.pi, angle)
            # TODO(synk): exact bin-center offset / wrap convention of
            # box_utils.decode_rot_binres is not shown in the truncated spec.

            cls = jax.nn.sigmoid(cls_logit)
            # TODO(synk): assumes hm_pred enters as raw logits (pcdet sigmoids
            # at decode); drop sigmoid if hm is pre-activated upstream.
            score = jnp.max(cls, axis=-1, keepdims=True)

            # single packed, lane-contiguous store: box(7) | cls(C) | score(1)
            out_ref[bi] = jnp.concatenate(
                [x, y, hei_g, dim_g, angle, cls, score], axis=-1)

    itemsize = jnp.dtype(fdt).itemsize
    cost = pl.CostEstimate(
        flops=2 * B * k * n * c_total,                 # one-hot matmul dominates
        transcendentals=B * k * (3 + num_class),       # exp(dim) + sigmoid(hm)
        bytes_accessed=B * (c_total * n * itemsize + k * 4 + k * c_out * 4))

    packed = pl.pallas_call(
        kernel,
        out_shape=jax.ShapeDtypeStruct((B, k, c_out), jnp.float32),
        grid=(gb,),
        in_specs=[pl.BlockSpec((bpb, k), lambda g: (g, 0)),
                  pl.BlockSpec((bpb, c_total, n), lambda g: (g, 0, 0))],
        out_specs=pl.BlockSpec((bpb, k, c_out), lambda g: (g, 0, 0)),
        compiler_params=pltpu.CompilerParams(
            dimension_semantics=("parallel",)),
        cost_estimate=cost,
    )(inds, feat)

    # TODO(synk): padded inds slots are decoded unconditionally, matching the
    # reference (_gather_feat is called without a mask).
    box = packed[..., :7]                      # (B, K, 7)
    cls = packed[..., 7:7 + num_class]         # (B, K, num_class)
    score = packed[..., 7 + num_class:]        # (B, K, 1)
    return box, cls, score


def _reference_decode(hm, offset, height, dim, rot, inds):
    """Pure-JAX mirror of the decode for a numerical self-check."""
    B, num_class, fh, fw = hm.shape
    n = fh * fw
    num_bins = rot.shape[1] // 2
    idx = inds[..., None].astype(jnp.int32)

    def gather(t):  # _transpose_and_gather_feat
        tt = jnp.transpose(t, (0, 2, 3, 1)).reshape(B, n, t.shape[1])
        return jnp.take_along_axis(tt, idx, axis=1).astype(jnp.float32)

    off = gather(offset)
    hei = gather(height)
    dd = jnp.exp(gather(dim))
    rr = gather(rot)
    cls = jax.nn.sigmoid(gather(hm))
    xs_i = (inds % fw).astype(jnp.float32)[..., None]
    ys_i = (inds // fw).astype(jnp.float32)[..., None]
    x = (xs_i + off[..., 0:1]) * (FEATURE_MAP_STRIDE * VOXEL_SIZE[0]) + POINT_CLOUD_RANGE[0]
    y = (ys_i + off[..., 1:2]) * (FEATURE_MAP_STRIDE * VOXEL_SIZE[1]) + POINT_CLOUD_RANGE[1]
    rot_bin, rot_res = rr[..., :num_bins], rr[..., num_bins:]
    bin_id = jnp.argmax(rot_bin, axis=-1)
    apb = 2.0 * math.pi / num_bins
    res = jnp.take_along_axis(rot_res, bin_id[..., None], axis=-1) * (apb * 0.5)
    angle = bin_id[..., None].astype(jnp.float32) * apb + res
    angle = jnp.where(angle > math.pi, angle - 2.0 * math.pi, angle)
    score = jnp.max(cls, axis=-1, keepdims=True)
    box = jnp.concatenate([x, y, hei, dd, angle], axis=-1)
    return box, cls, score


if __name__ == "__main__":
    key = jax.random.PRNGKey(0)
    ks = jax.random.split(key, 6)
    B = 2
    hm = jax.random.normal(ks[0], (B, NUM_CLASS, H, W), jnp.float32)
    offset = jax.random.normal(ks[1], (B, 2, H, W), jnp.float32)
    height = jax.random.normal(ks[2], (B, 1, H, W), jnp.float32)
    dim = jax.random.normal(ks[3], (B, 3, H, W), jnp.float32)
    rot = jax.random.normal(ks[4], (B, NUM_ROT_CH, H, W), jnp.float32)
    inds = jax.random.randint(ks[5], (B, K), 0, H * W, dtype=jnp.int32)

    box, cls, score = centernet_box3d_decode(hm, offset, height, dim, rot, inds)
    jax.block_until_ready((box, cls, score))
    assert box.shape == (B, K, 7)
    assert cls.shape == (B, K, NUM_CLASS)
    assert score.shape == (B, K, 1)
    assert bool(jnp.isfinite(box).all()) and bool(jnp.isfinite(cls).all())

    rbox, rcls, rscore = _reference_decode(hm, offset, height, dim, rot, inds)
    assert bool(jnp.allclose(box, rbox, rtol=1e-3, atol=1e-3))
    assert bool(jnp.allclose(cls, rcls, rtol=1e-3, atol=1e-3))
    assert bool(jnp.allclose(score, rscore, rtol=1e-3, atol=1e-3))
    print("KERNEL_OK")
</pallas_src>

<mosaic_0001>
module attributes {stable_mosaic.version = 11 : i64} {
  func.func @kernel(%arg0: i32, %arg1: memref<2x8xi32, #tpu.memory_space<vmem>>, %arg2: memref<2x33x256xf32, #tpu.memory_space<vmem>>, %arg3: memref<2x8x11xf32, #tpu.memory_space<vmem>>) attributes {dimension_semantics = [#tpu.dimension_semantics<parallel>], iteration_bounds = array<i64: 1>, scalar_prefetch = 0 : i64, scratch_operands = 0 : i64, tpu.core_type = #tpu.core_type<tc>, window_params = [{transform_indices = @transform_0, window_bounds = array<i64: 2, 8>}, {transform_indices = @transform_1, window_bounds = array<i64: 2, 33, 256>}, {transform_indices = @transform_2, window_bounds = array<i64: 2, 8, 11>}]} {
    %0 = tpu.iota {dimensions = array<i32: 1>} : vector<8x256xi32>
    %1 = tpu.iota {dimensions = array<i32: 1>} : vector<8x12xi32>
    %c0 = arith.constant 0 : index
    %c0_0 = arith.constant 0 : index
    %2 = vector.load %arg1[%c0, %c0_0] : memref<2x8xi32, #tpu.memory_space<vmem>>, vector<1x8xi32>
    %3 = vector.shape_cast %2 : vector<1x8xi32> to vector<8xi32>
    %4 = vector.shape_cast %3 : vector<8xi32> to vector<8x1xi32>
    %5 = vector.broadcast %4 : vector<8x1xi32> to vector<8x256xi32>
    %6 = arith.cmpi eq, %0, %5 : vector<8x256xi32>
    %7 = arith.extui %6 : vector<8x256xi1> to vector<8x256xi32>
    %8 = arith.sitofp %7 : vector<8x256xi32> to vector<8x256xf32>
    %c0_1 = arith.constant 0 : index
    %c0_2 = arith.constant 0 : index
    %c0_3 = arith.constant 0 : index
    %9 = vector.load %arg2[%c0_1, %c0_2, %c0_3] : memref<2x33x256xf32, #tpu.memory_space<vmem>>, vector<1x33x256xf32>
    %10 = vector.shape_cast %9 : vector<1x33x256xf32> to vector<33x256xf32>
    %cst = arith.constant dense<0.000000e+00> : vector<8x33xf32>
    %11 = tpu.matmul %8, %10, %cst {dimension_numbers = #tpu.dot_dimension_numbers<[1], [1], [0], [0], [0, 0, 1, 0], [], []>, precision = #tpu.contract_precision<fp32>} : vector<8x256xf32>, vector<33x256xf32>, vector<8x33xf32> -> vector<8x33xf32>
    %12 = vector.extract_strided_slice %11 {offsets = [0, 0], sizes = [8, 3], strides = [1, 1]} : vector<8x33xf32> to vector<8x3xf32>
    %13 = vector.extract_strided_slice %11 {offsets = [0, 3], sizes = [8, 1], strides = [1, 1]} : vector<8x33xf32> to vector<8x1xf32>
    %14 = vector.extract_strided_slice %11 {offsets = [0, 4], sizes = [8, 1], strides = [1, 1]} : vector<8x33xf32> to vector<8x1xf32>
    %15 = vector.extract_strided_slice %11 {offsets = [0, 5], sizes = [8, 1], strides = [1, 1]} : vector<8x33xf32> to vector<8x1xf32>
    %16 = vector.extract_strided_slice %11 {offsets = [0, 6], sizes = [8, 3], strides = [1, 1]} : vector<8x33xf32> to vector<8x3xf32>
    %17 = math.exp %16 : vector<8x3xf32>
    %18 = vector.extract_strided_slice %11 {offsets = [0, 9], sizes = [8, 12], strides = [1, 1]} : vector<8x33xf32> to vector<8x12xf32>
    %19 = vector.extract_strided_slice %11 {offsets = [0, 21], sizes = [8, 12], strides = [1, 1]} : vector<8x33xf32> to vector<8x12xf32>
    %c15_i32 = arith.constant 15 : i32
    %20 = vector.broadcast %c15_i32 : i32 to vector<8xi32>
    %21 = arith.andi %3, %20 : vector<8xi32>
    %c4_i32 = arith.constant 4 : i32
    %22 = vector.broadcast %c4_i32 : i32 to vector<8xi32>
    %23 = arith.shrsi %3, %22 : vector<8xi32>
    %24 = arith.sitofp %21 : vector<8xi32> to vector<8xf32>
    %25 = vector.shape_cast %24 : vector<8xf32> to vector<8x1xf32>
    %26 = arith.addf %25, %13 : vector<8x1xf32>
    %cst_4 = arith.constant 4.000000e-01 : f32
    %27 = vector.broadcast %cst_4 : f32 to vector<8x1xf32>
    %28 = arith.mulf %26, %27 : vector<8x1xf32>
    %cst_5 = arith.constant -5.120000e+01 : f32
    %29 = vector.broadcast %cst_5 : f32 to vector<8x1xf32>
    %30 = arith.addf %28, %29 : vector<8x1xf32>
    %31 = arith.sitofp %23 : vector<8xi32> to vector<8xf32>
    %32 = vector.shape_cast %31 : vector<8xf32> to vector<8x1xf32>
    %33 = arith.addf %32, %14 : vector<8x1xf32>
    %cst_6 = arith.constant 4.000000e-01 : f32
    %34 = vector.broadcast %cst_6 : f32 to vector<8x1xf32>
    %35 = arith.mulf %33, %34 : vector<8x1xf32>
    %cst_7 = arith.constant -5.120000e+01 : f32
    %36 = vector.broadcast %cst_7 : f32 to vector<8x1xf32>
    %37 = arith.addf %35, %36 : vector<8x1xf32>
    %cst_8 = arith.constant dense<0xFF800000> : vector<8xf32>
    %38 = vector.multi_reduction <maximumf>, %18, %cst_8 [1] : vector<8x12xf32> to vector<8xf32>
    %39 = vector.shape_cast %38 : vector<8xf32> to vector<8x1xf32>
    %40 = vector.broadcast %39 : vector<8x1xf32> to vector<8x12xf32>
    %41 = arith.cmpf oeq, %18, %40 : vector<8x12xf32>
    %c12_i32 = arith.constant 12 : i32
    %42 = vector.broadcast %c12_i32 : i32 to vector<8x12xi32>
    %43 = arith.select %41, %1, %42 : vector<8x12xi1>, vector<8x12xi32>
    %cst_9 = arith.constant dense<2147483647> : vector<8xi32>
    %44 = vector.multi_reduction <minsi>, %43, %cst_9 [1] : vector<8x12xi32> to vector<8xi32>
    %45 = vector.shape_cast %44 : vector<8xi32> to vector<8x1xi32>
    %46 = vector.broadcast %45 : vector<8x1xi32> to vector<8x12xi32>
    %47 = arith.cmpi eq, %1, %46 : vector<8x12xi32>
    %cst_10 = arith.constant 0.000000e+00 : f32
    %48 = vector.broadcast %cst_10 : f32 to vector<8x12xf32>
    %49 = arith.select %47, %19, %48 : vector<8x12xi1>, vector<8x12xf32>
    %cst_11 = arith.constant dense<0.000000e+00> : vector<8xf32>
    %50 = vector.multi_reduction <add>, %49, %cst_11 [1] : vector<8x12xf32> to vector<8xf32>
    %51 = vector.shape_cast %50 : vector<8xf32> to vector<8x1xf32>
    %cst_12 = arith.constant 0.261799395 : f32
    %52 = vector.broadcast %cst_12 : f32 to vector<8x1xf32>
    %53 = arith.mulf %51, %52 : vector<8x1xf32>
    %54 = arith.sitofp %45 : vector<8x1xi32> to vector<8x1xf32>
    %cst_13 = arith.constant 0.52359879 : f32
    %55 = vector.broadcast %cst_13 : f32 to vector<8x1xf32>
    %56 = arith.mulf %54, %55 : vector<8x1xf32>
    %57 = arith.addf %56, %53 : vector<8x1xf32>
    %cst_14 = arith.constant 3.14159274 : f32
    %58 = vector.broadcast %cst_14 : f32 to vector<8x1xf32>
    %59 = arith.cmpf ogt, %57, %58 : vector<8x1xf32>
    %cst_15 = arith.constant 6.28318548 : f32
    %60 = vector.broadcast %cst_15 : f32 to vector<8x1xf32>
    %61 = arith.subf %57, %60 : vector<8x1xf32>
    %62 = arith.select %59, %61, %57 : vector<8x1xi1>, vector<8x1xf32>
    %63 = arith.negf %12 : vector<8x3xf32>
    %64 = math.exp %63 : vector<8x3xf32>
    %cst_16 = arith.constant 1.000000e+00 : f32
    %65 = vector.broadcast %cst_16 : f32 to vector<8x3xf32>
    %66 = arith.addf %65, %64 : vector<8x3xf32>
    %67 = arith.divf %65, %66 : vector<8x3xf32>
    %cst_17 = arith.constant dense<0xFF800000> : vector<8xf32>
    %68 = vector.multi_reduction <maximumf>, %67, %cst_17 [1] : vector<8x3xf32> to vector<8xf32>
    %69 = vector.shape_cast %68 : vector<8xf32> to vector<8x1xf32>
    %70 = tpu.concatenate %30, %37, %15, %17, %62, %67, %69 in 1 : vector<8x1xf32>, vector<8x1xf32>, vector<8x1xf32>, vector<8x3xf32>, vector<8x1xf32>, vector<8x3xf32>, vector<8x1xf32> -> vector<8x11xf32>
    %c0_18 = arith.constant 0 : index
    %c0_19 = arith.constant 0 : index
    %c0_20 = arith.constant 0 : index
    %71 = vector.load %arg3[%c0_18, %c0_19, %c0_20] : memref<2x8x11xf32, #tpu.memory_space<vmem>>, vector<1x8x11xf32>
    %72 = vector.shape_cast %71 : vector<1x8x11xf32> to vector<8x11xf32>
    %73 = vector.shape_cast %70 : vector<8x11xf32> to vector<1x8x11xf32>
    tpu.vector_store %arg3[%c0_18, %c0_19, %c0_20], %73 {strides = array<i32>} : memref<2x8x11xf32, #tpu.memory_space<vmem>>, vector<1x8x11xf32>,
    %c1 = arith.constant 1 : index
    %c0_21 = arith.constant 0 : index
    %74 = vector.load %arg1[%c1, %c0_21] : memref<2x8xi32, #tpu.memory_space<vmem>>, vector<1x8xi32>
    %75 = vector.shape_cast %74 : vector<1x8xi32> to vector<8xi32>
    %76 = vector.shape_cast %75 : vector<8xi32> to vector<8x1xi32>
    %77 = vector.broadcast %76 : vector<8x1xi32> to vector<8x256xi32>
    %78 = arith.cmpi eq, %0, %77 : vector<8x256xi32>
    %79 = arith.extui %78 : vector<8x256xi1> to vector<8x256xi32>
    %80 = arith.sitofp %79 : vector<8x256xi32> to vector<8x256xf32>
    %c1_22 = arith.constant 1 : index
    %c0_23 = arith.constant 0 : index
    %c0_24 = arith.constant 0 : index
    %81 = vector.load %arg2[%c1_22, %c0_23, %c0_24] : memref<2x33x256xf32, #tpu.memory_space<vmem>>, vector<1x33x256xf32>
    %82 = vector.shape_cast %81 : vector<1x33x256xf32> to vector<33x256xf32>
    %cst_25 = arith.constant dense<0.000000e+00> : vector<8x33xf32>
    %83 = tpu.matmul %80, %82, %cst_25 {dimension_numbers = #tpu.dot_dimension_numbers<[1], [1], [0], [0], [0, 0, 1, 0], [], []>, precision = #tpu.contract_precision<fp32>} : vector<8x256xf32>, vector<33x256xf32>, vector<8x33xf32> -> vector<8x33xf32>
    %84 = vector.extract_strided_slice %83 {offsets = [0, 0], sizes = [8, 3], strides = [1, 1]} : vector<8x33xf32> to vector<8x3xf32>
    %85 = vector.extract_strided_slice %83 {offsets = [0, 3], sizes = [8, 1], strides = [1, 1]} : vector<8x33xf32> to vector<8x1xf32>
    %86 = vector.extract_strided_slice %83 {offsets = [0, 4], sizes = [8, 1], strides = [1, 1]} : vector<8x33xf32> to vector<8x1xf32>
    %87 = vector.extract_strided_slice %83 {offsets = [0, 5], sizes = [8, 1], strides = [1, 1]} : vector<8x33xf32> to vector<8x1xf32>
    %88 = vector.extract_strided_slice %83 {offsets = [0, 6], sizes = [8, 3], strides = [1, 1]} : vector<8x33xf32> to vector<8x3xf32>
    %89 = math.exp %88 : vector<8x3xf32>
    %90 = vector.extract_strided_slice %83 {offsets = [0, 9], sizes = [8, 12], strides = [1, 1]} : vector<8x33xf32> to vector<8x12xf32>
    %91 = vector.extract_strided_slice %83 {offsets = [0, 21], sizes = [8, 12], strides = [1, 1]} : vector<8x33xf32> to vector<8x12xf32>
    %c15_i32_26 = arith.constant 15 : i32
    %92 = vector.broadcast %c15_i32_26 : i32 to vector<8xi32>
    %93 = arith.andi %75, %92 : vector<8xi32>
    %c4_i32_27 = arith.constant 4 : i32
    %94 = vector.broadcast %c4_i32_27 : i32 to vector<8xi32>
    %95 = arith.shrsi %75, %94 : vector<8xi32>
    %96 = arith.sitofp %93 : vector<8xi32> to vector<8xf32>
    %97 = vector.shape_cast %96 : vector<8xf32> to vector<8x1xf32>
    %98 = arith.addf %97, %85 : vector<8x1xf32>
    %cst_28 = arith.constant 4.000000e-01 : f32
    %99 = vector.broadcast %cst_28 : f32 to vector<8x1xf32>
    %100 = arith.mulf %98, %99 : vector<8x1xf32>
    %cst_29 = arith.constant -5.120000e+01 : f32
    %101 = vector.broadcast %cst_29 : f32 to vector<8x1xf32>
    %102 = arith.addf %100, %101 : vector<8x1xf32>
    %103 = arith.sitofp %95 : vector<8xi32> to vector<8xf32>
    %104 = vector.shape_cast %103 : vector<8xf32> to vector<8x1xf32>
    %105 = arith.addf %104, %86 : vector<8x1xf32>
    %cst_30 = arith.constant 4.000000e-01 : f32
    %106 = vector.broadcast %cst_30 : f32 to vector<8x1xf32>
    %107 = arith.mulf %105, %106 : vector<8x1xf32>
    %cst_31 = arith.constant -5.120000e+01 : f32
    %108 = vector.broadcast %cst_31 : f32 to vector<8x1xf32>
    %109 = arith.addf %107, %108 : vector<8x1xf32>
    %cst_32 = arith.constant dense<0xFF800000> : vector<8xf32>
    %110 = vector.multi_reduction <maximumf>, %90, %cst_32 [1] : vector<8x12xf32> to vector<8xf32>
    %111 = vector.shape_cast %110 : vector<8xf32> to vector<8x1xf32>
    %112 = vector.broadcast %111 : vector<8x1xf32> to vector<8x12xf32>
    %113 = arith.cmpf oeq, %90, %112 : vector<8x12xf32>
    %c12_i32_33 = arith.constant 12 : i32
    %114 = vector.broadcast %c12_i32_33 : i32 to vector<8x12xi32>
    %115 = arith.select %113, %1, %114 : vector<8x12xi1>, vector<8x12xi32>
    %cst_34 = arith.constant dense<2147483647> : vector<8xi32>
    %116 = vector.multi_reduction <minsi>, %115, %cst_34 [1] : vector<8x12xi32> to vector<8xi32>
    %117 = vector.shape_cast %116 : vector<8xi32> to vector<8x1xi32>
    %118 = vector.broadcast %117 : vector<8x1xi32> to vector<8x12xi32>
    %119 = arith.cmpi eq, %1, %118 : vector<8x12xi32>
    %cst_35 = arith.constant 0.000000e+00 : f32
    %120 = vector.broadcast %cst_35 : f32 to vector<8x12xf32>
    %121 = arith.select %119, %91, %120 : vector<8x12xi1>, vector<8x12xf32>
    %cst_36 = arith.constant dense<0.000000e+00> : vector<8xf32>
    %122 = vector.multi_reduction <add>, %121, %cst_36 [1] : vector<8x12xf32> to vector<8xf32>
    %123 = vector.shape_cast %122 : vector<8xf32> to vector<8x1xf32>
    %cst_37 = arith.constant 0.261799395 : f32
    %124 = vector.broadcast %cst_37 : f32 to vector<8x1xf32>
    %125 = arith.mulf %123, %124 : vector<8x1xf32>
    %126 = arith.sitofp %117 : vector<8x1xi32> to vector<8x1xf32>
    %cst_38 = arith.constant 0.52359879 : f32
    %127 = vector.broadcast %cst_38 : f32 to vector<8x1xf32>
    %128 = arith.mulf %126, %127 : vector<8x1xf32>
    %129 = arith.addf %128, %125 : vector<8x1xf32>
    %cst_39 = arith.constant 3.14159274 : f32
    %130 = vector.broadcast %cst_39 : f32 to vector<8x1xf32>
    %131 = arith.cmpf ogt, %129, %130 : vector<8x1xf32>
    %cst_40 = arith.constant 6.28318548 : f32
    %132 = vector.broadcast %cst_40 : f32 to vector<8x1xf32>
    %133 = arith.subf %129, %132 : vector<8x1xf32>
    %134 = arith.select %131, %133, %129 : vector<8x1xi1>, vector<8x1xf32>
    %135 = arith.negf %84 : vector<8x3xf32>
    %136 = math.exp %135 : vector<8x3xf32>
    %cst_41 = arith.constant 1.000000e+00 : f32
    %137 = vector.broadcast %cst_41 : f32 to vector<8x3xf32>
    %138 = arith.addf %137, %136 : vector<8x3xf32>
    %139 = arith.divf %137, %138 : vector<8x3xf32>
    %cst_42 = arith.constant dense<0xFF800000> : vector<8xf32>
    %140 = vector.multi_reduction <maximumf>, %139, %cst_42 [1] : vector<8x3xf32> to vector<8xf32>
    %141 = vector.shape_cast %140 : vector<8xf32> to vector<8x1xf32>
    %142 = tpu.concatenate %102, %109, %87, %89, %134, %139, %141 in 1 : vector<8x1xf32>, vector<8x1xf32>, vector<8x1xf32>, vector<8x3xf32>, vector<8x1xf32>, vector<8x3xf32>, vector<8x1xf32> -> vector<8x11xf32>
    %c1_43 = arith.constant 1 : index
    %c0_44 = arith.constant 0 : index
    %c0_45 = arith.constant 0 : index
    %143 = vector.load %arg3[%c1_43, %c0_44, %c0_45] : memref<2x8x11xf32, #tpu.memory_space<vmem>>, vector<1x8x11xf32>
    %144 = vector.shape_cast %143 : vector<1x8x11xf32> to vector<8x11xf32>
    %145 = vector.shape_cast %142 : vector<8x11xf32> to vector<1x8x11xf32>
    tpu.vector_store %arg3[%c1_43, %c0_44, %c0_45], %145 {strides = array<i32>} : memref<2x8x11xf32, #tpu.memory_space<vmem>>, vector<1x8x11xf32>,
    return
  }
  func.func @transform_0(%arg0: i32) -> (i32, i32) {
    %c0_i32 = arith.constant 0 : i32
    %c0_i32_0 = arith.constant 0 : i32
    return %arg0, %c0_i32 : i32, i32
  }
  func.func @transform_1(%arg0: i32) -> (i32, i32, i32) {
    %c0_i32 = arith.constant 0 : i32
    %c0_i32_0 = arith.constant 0 : i32
    %c0_i32_1 = arith.constant 0 : i32
    return %arg0, %c0_i32, %c0_i32_0 : i32, i32, i32
  }
  func.func @transform_2(%arg0: i32) -> (i32, i32, i32) {
    %c0_i32 = arith.constant 0 : i32
    %c0_i32_0 = arith.constant 0 : i32
    %c0_i32_1 = arith.constant 0 : i32
    return %arg0, %c0_i32, %c0_i32_0 : i32, i32, i32
  }
}

</mosaic_0001>

<llo_original>
// kernel: centernet_box3d_decode.1
$region0: #{centernet_box3d_decode.1}
  #allocation0 [shape = 'u32[]', space=smem, size = 0x4, offset = 0x4, fixed_abs, tag = 'smem constant byte address 0x4 - core index']
  #allocation1 [shape = 'u32[144,128]{1,0:T(1,128)}', space=vmem, size = 0x12000, scoped, tag = 'internal scratch']
  %s0 = inlined_call_operand.vmem [shape: s32[2,8], index: 0, kind: input, shape index: {}]
  %s1 = inlined_call_operand.vmem [shape: f32[2,33,256], index: 1, kind: input, shape index: {}]
  %s2 = inlined_call_operand.vmem [shape: f32[2,8,11], index: 2, kind: output, shape index: {}]
  %s3 = sld [smem:[#allocation0]]
  $region18: #{centernet_box3d_decode.1} parent=0
    _
  %s5 = ssub.s32 1, %s3
  %s6 = scalar_select 0, %s5, %s3
  // Predicated region
  $region2: #{centernet_box3d_decode.1} parent=0 // pred_check
    _
  $region3: #{centernet_box3d_decode.1} parent=0 // pred_check_branch
    %8 = sbr.rel (0) target = $region5
  $region4: #{centernet_box3d_decode.1} parent=0 // pred_region
    _
  $region5: #{centernet_box3d_decode.1} parent=0 // pred_fallthru
    _
  // Predicated region
  $region6: #{centernet_box3d_decode.1} parent=0 // pred_check
    _
  $region7: #{centernet_box3d_decode.1} parent=0 // pred_check_branch
    %10 = sbr.rel (0) target = $region9
  $region8: #{centernet_box3d_decode.1} parent=0 // pred_region
    _
  $region9: #{centernet_box3d_decode.1} parent=0 // pred_fallthru
    _
  %v11 = vlaneseq
  %v12 = vand.u32 %v11, 127
  %v13 = vadd.s32 %v12, 128
  %v14 = vld [vmem:[%s0] sm:$0x1]
  %v15 = vlaneseq
  %v16 = vshrl.u32 %v15, 7
  %v17 = vsub.s32 0, %v16
  %v18 = vrot.slane %v14, %v17
  %20 = vbcast.lane.b32.xlu0 %v18, 256
  %v21 = vpop.permute.xlu0 %20
  %vm22 = vcmp.eq.s32.totalorder %v12, %v21
  %vm23 = vcmp.eq.s32.totalorder %v13, %v21
  %v24 = vsel %vm22, 1, 0
  %v25 = vsel %vm23, 1, 0
  %v26 = vcvt.s32.f32 %v24
  %v27 = vcvt.s32.f32 %v25
  %v28 = vld [vmem:[%s1] sm:$0xff]
  %v29 = vld [vmem:[%s1 + $0x8] sm:$0xff]
  %v30 = vld [vmem:[%s1 + $0x10] sm:$0xff]
  %v31 = vld [vmem:[%s1 + $0x18] sm:$0xff]
  %v32 = vld [vmem:[%s1 + $0x20] sm:$0xff]
  %v33 = vld [vmem:[%s1 + $0x28] sm:$0xff]
  %v34 = vld [vmem:[%s1 + $0x30] sm:$0xff]
  %v35 = vld [vmem:[%s1 + $0x38] sm:$0xff]
  %v36 = vld [vmem:[%s1 + $0x40] sm:$0x1]
  %v37 = vld [vmem:[%s1 + $0x48] sm:$0x1]
  %38 = vmatprep.subr.mxu0 0.0
  %39 = vmatpush1.xpose.msra.mxu0 0.0
  %40 = vmatprep.subr.mxu0 0.0
  %41 = vmatpush1.xpose.msra.mxu0 0.0
  %42 = vmatprep.subr.mxu0 0.0
  %43 = vmatpush1.xpose.msra.mxu0 0.0
  %44 = vmatprep.subr.mxu0 0.0
  %45 = vmatpush1.xpose.msra.mxu0 0.0
  %46 = vmatprep.subr.mxu0 0.0
  %47 = vmatpush1.xpose.msra.mxu0 0.0
  %48 = vmatprep.subr.mxu0 0.0
  %49 = vmatpush1.xpose.msra.mxu0 0.0
  %50 = vmatprep.subr.mxu0 0.0
  %51 = vmatpush1.xpose.msra.mxu0 0.0
  %52 = vmatprep.subr.mxu0 0.0
  %53 = vmatpush1.xpose.msra.mxu0 0.0
  %54 = vmatprep.subr.mxu0 0.0
  %55 = vmatpush1.xpose.msra.mxu0 0.0
  %56 = vmatprep.subr.mxu0 0.0
  %57 = vmatpush1.xpose.msra.mxu0 0.0
  %58 = vmatprep.subr.mxu0 0.0
  %59 = vmatpush1.xpose.msra.mxu0 0.0
  %v60 = vand.u32 %v37, 4294901760
  %61 = vmatprep.subr.mxu0 %v60
  %v62 = vand.u32 %v36, 4294901760
  %63 = vmatpush1.xpose.msra.mxu0 %v62
  %v64 = vand.u32 %v35, 4294901760
  %65 = vmatprep.subr.mxu0 %v64
  %v66 = vand.u32 %v34, 4294901760
  %67 = vmatpush1.xpose.msra.mxu0 %v66
  %v68 = vand.u32 %v33, 4294901760
  %69 = vmatprep.subr.mxu0 %v68
  %v70 = vand.u32 %v32, 4294901760
  %71 = vmatpush1.xpose.msra.mxu0 %v70
  %v72 = vand.u32 %v31, 4294901760
  %73 = vmatprep.subr.mxu0 %v72
  %v74 = vand.u32 %v30, 4294901760
  %75 = vmatpush1.xpose.msra.mxu0 %v74
  %v76 = vand.u32 %v29, 4294901760
  %77 = vmatprep.subr.mxu0 %v76
  %v78 = vand.u32 %v28, 4294901760
  %79 = vmatpush1.xpose.msra.mxu0 %v78
  %80 = vmatprep.subr.mxu0 0.0
  %81 = vmatpush2.xpose.msra.mxu0 0.0
  %82 = vmatprep.subr.mxu0 0.0
  %83 = vmatpush2.xpose.msra.mxu0 0.0
  %84 = vmatprep.subr.mxu0 0.0
  %85 = vmatpush2.xpose.msra.mxu0 0.0
  %86 = vmatprep.subr.mxu0 0.0
  %87 = vmatpush2.xpose.msra.mxu0 0.0
  %88 = vmatprep.subr.mxu0 0.0
  %89 = vmatpush2.xpose.msra.mxu0 0.0
  %90 = vmatprep.subr.mxu0 0.0
  %91 = vmatpush2.xpose.msra.mxu0 0.0
  %92 = vmatprep.subr.mxu0 0.0
  %93 = vmatpush2.xpose.msra.mxu0 0.0
  %94 = vmatprep.subr.mxu0 0.0
  %95 = vmatpush2.xpose.msra.mxu0 0.0
  %96 = vmatprep.subr.mxu0 0.0
  %97 = vmatpush2.xpose.msra.mxu0 0.0
  %98 = vmatprep.subr.mxu0 0.0
  %99 = vmatpush2.xpose.msra.mxu0 0.0
  %100 = vmatprep.subr.mxu0 0.0
  %101 = vmatpush2.xpose.msra.mxu0 0.0
  %102 = vmatprep.subr.mxu0 0.0
  %103 = vmatpush2.xpose.msra.mxu0 0.0
  %104 = vmatprep.subr.mxu0 0.0
  %105 = vmatpush2.xpose.msra.mxu0 0.0
  %106 = vmatprep.subr.mxu0 0.0
  %107 = vmatpush2.xpose.msra.mxu0 0.0
  %108 = vmatprep.subr.mxu0 0.0
  %109 = vmatpush2.xpose.msra.mxu0 0.0
  %110 = vmatprep.subr.mxu0 0.0
  %111 = vmatpush2.xpose.msra.mxu0 0.0
  %v112 = vand.u32 %v27, 4294901760
  %v113 = vsub.f32 %v27, %v112
  %v114 = vand.u32 %v113, 4294901760
  %v115 = vsub.f32 %v113, %v114
  %v116 = vand.u32 %v115, 4294901760
  %117 = vmatprep.mubr.f32.mxu0 %v116
  %v118 = vand.u32 %v26, 4294901760
  %v119 = vsub.f32 %v26, %v118
  %v120 = vand.u32 %v119, 4294901760
  %v121 = vsub.f32 %v119, %v120
  %v122 = vand.u32 %v121, 4294901760
  %123 = vmatmul.mubr.f32.gmra.mxu0 %v122
  %v124 = vpop.f32.mrf.mxu0
  %v125 = vadd.f32 0.0, %v124
  %v126 = vpop.f32.mrf.mxu0
  %127 = vdwg.mxu0
  %128 = vmatprep.subr.mxu0 0.0
  %129 = vmatpush1.xpose.msra.mxu0 0.0
  %130 = vmatprep.subr.mxu0 0.0
  %131 = vmatpush1.xpose.msra.mxu0 0.0
  %132 = vmatprep.subr.mxu0 0.0
  %133 = vmatpush1.xpose.msra.mxu0 0.0
  %134 = vmatprep.subr.mxu0 0.0
  %135 = vmatpush1.xpose.msra.mxu0 0.0
  %136 = vmatprep.subr.mxu0 0.0
  %137 = vmatpush1.xpose.msra.mxu0 0.0
  %138 = vmatprep.subr.mxu0 0.0
  %139 = vmatpush1.xpose.msra.mxu0 0.0
  %140 = vmatprep.subr.mxu0 0.0
  %141 = vmatpush1.xpose.msra.mxu0 0.0
  %142 = vmatprep.subr.mxu0 0.0
  %143 = vmatpush1.xpose.msra.mxu0 0.0
  %144 = vmatprep.subr.mxu0 0.0
  %145 = vmatpush1.xpose.msra.mxu0 0.0
  %146 = vmatprep.subr.mxu0 0.0
  %147 = vmatpush1.xpose.msra.mxu0 0.0
  %148 = vmatprep.subr.mxu0 0.0
  %149 = vmatpush1.xpose.msra.mxu0 0.0
  %v150 = vand.u32 %v37, 4294901760
  %v151 = vsub.f32 %v37, %v150
  %v152 = vand.u32 %v151, 4294901760
  %v153 = vsub.f32 %v151, %v152
  %v154 = vand.u32 %v153, 4294901760
  %155 = vmatprep.subr.mxu0 %v154
  %v156 = vand.u32 %v36, 4294901760
  %v157 = vsub.f32 %v36, %v156
  %v158 = vand.u32 %v157, 4294901760
  %v159 = vsub.f32 %v157, %v158
  %v160 = vand.u32 %v159, 4294901760
  %161 = vmatpush1.xpose.msra.mxu0 %v160
  %v162 = vand.u32 %v35, 4294901760
  %v163 = vsub.f32 %v35, %v162
  %v164 = vand.u32 %v163, 4294901760
  %v165 = vsub.f32 %v163, %v164
  %v166 = vand.u32 %v165, 4294901760
  %167 = vmatprep.subr.mxu0 %v166
  %v168 = vand.u32 %v34, 4294901760
  %v169 = vsub.f32 %v34, %v168
  %v170 = vand.u32 %v169, 4294901760
  %v171 = vsub.f32 %v169, %v170
  %v172 = vand.u32 %v171, 4294901760
  %173 = vmatpush1.xpose.msra.mxu0 %v172
  %v174 = vand.u32 %v33, 4294901760
  %v175 = vsub.f32 %v33, %v174
  %v176 = vand.u32 %v175, 4294901760
  %v177 = vsub.f32 %v175, %v176
  %v178 = vand.u32 %v177, 4294901760
  %179 = vmatprep.subr.mxu0 %v178
  %v180 = vand.u32 %v32, 4294901760
  %v181 = vsub.f32 %v32, %v180
  %v182 = vand.u32 %v181, 4294901760
  %v183 = vsub.f32 %v181, %v182
  %v184 = vand.u32 %v183, 4294901760
  %185 = vmatpush1.xpose.msra.mxu0 %v184
  %v186 = vand.u32 %v31, 4294901760
  %v187 = vsub.f32 %v31, %v186
  %v188 = vand.u32 %v187, 4294901760
  %v189 = vsub.f32 %v187, %v188
  %v190 = vand.u32 %v189, 4294901760
  %191 = vmatprep.subr.mxu0 %v190
  %v192 = vand.u32 %v30, 4294901760
  %v193 = vsub.f32 %v30, %v192
  %v194 = vand.u32 %v193, 4294901760
  %v195 = vsub.f32 %v193, %v194
  %v196 = vand.u32 %v195, 4294901760
  %197 = vmatpush1.xpose.msra.mxu0 %v196
  %v198 = vand.u32 %v29, 4294901760
  %v199 = vsub.f32 %v29, %v198
  %v200 = vand.u32 %v199, 4294901760
  %v201 = vsub.f32 %v199, %v200
  %v202 = vand.u32 %v201, 4294901760
  %203 = vmatprep.subr.mxu0 %v202
  %v204 = vand.u32 %v28, 4294901760
  %v205 = vsub.f32 %v28, %v204
  %v206 = vand.u32 %v205, 4294901760
  %v207 = vsub.f32 %v205, %v206
  %v208 = vand.u32 %v207, 4294901760
  %209 = vmatpush1.xpose.msra.mxu0 %v208
  %210 = vmatprep.subr.mxu0 0.0
  %211 = vmatpush2.xpose.msra.mxu0 0.0
  %212 = vmatprep.subr.mxu0 0.0
  %213 = vmatpush2.xpose.msra.mxu0 0.0
  %214 = vmatprep.subr.mxu0 0.0
  %215 = vmatpush2.xpose.msra.mxu0 0.0
  %216 = vmatprep.subr.mxu0 0.0
  %217 = vmatpush2.xpose.msra.mxu0 0.0
  %218 = vmatprep.subr.mxu0 0.0
  %219 = vmatpush2.xpose.msra.mxu0 0.0
  %220 = vmatprep.subr.mxu0 0.0
  %221 = vmatpush2.xpose.msra.mxu0 0.0
  %222 = vmatprep.subr.mxu0 0.0
  %223 = vmatpush2.xpose.msra.mxu0 0.0
  %224 = vmatprep.subr.mxu0 0.0
  %225 = vmatpush2.xpose.msra.mxu0 0.0
  %226 = vmatprep.subr.mxu0 0.0
  %227 = vmatpush2.xpose.msra.mxu0 0.0
  %228 = vmatprep.subr.mxu0 0.0
  %229 = vmatpush2.xpose.msra.mxu0 0.0
  %230 = vmatprep.subr.mxu0 0.0
  %231 = vmatpush2.xpose.msra.mxu0 0.0
  %232 = vmatprep.subr.mxu0 0.0
  %233 = vmatpush2.xpose.msra.mxu0 0.0
  %234 = vmatprep.subr.mxu0 0.0
  %235 = vmatpush2.xpose.msra.mxu0 0.0
  %236 = vmatprep.subr.mxu0 0.0
  %237 = vmatpush2.xpose.msra.mxu0 0.0
  %238 = vmatprep.subr.mxu0 0.0
  %239 = vmatpush2.xpose.msra.mxu0 0.0
  %240 = vmatprep.subr.mxu0 0.0
  %241 = vmatpush2.xpose.msra.mxu0 0.0
  %v242 = vand.u32 %v27, 4294901760
  %243 = vmatprep.mubr.f32.mxu0 %v242
  %v244 = vand.u32 %v26, 4294901760
  %245 = vmatmul.mubr.f32.gmra.mxu0 %v244
  %v246 = vpop.f32.mrf.mxu0
  %v247 = vadd.f32 %v125, %v246
  %v248 = vpop.f32.mrf.mxu0
  %249 = vdwg.mxu0
  %250 = vmatprep.subr.mxu0 0.0
  %251 = vmatpush1.xpose.msra.mxu0 0.0
  %252 = vmatprep.subr.mxu0 0.0
  %253 = vmatpush1.xpose.msra.mxu0 0.0
  %254 = vmatprep.subr.mxu0 0.0
  %255 = vmatpush1.xpose.msra.mxu0 0.0
  %256 = vmatprep.subr.mxu0 0.0
  %257 = vmatpush1.xpose.msra.mxu0 0.0
  %258 = vmatprep.subr.mxu0 0.0
  %259 = vmatpush1.xpose.msra.mxu0 0.0
  %260 = vmatprep.subr.mxu0 0.0
  %261 = vmatpush1.xpose.msra.mxu0 0.0
  %262 = vmatprep.subr.mxu0 0.0
  %263 = vmatpush1.xpose.msra.mxu0 0.0
  %264 = vmatprep.subr.mxu0 0.0
  %265 = vmatpush1.xpose.msra.mxu0 0.0
  %266 = vmatprep.subr.mxu0 0.0
  %267 = vmatpush1.xpose.msra.mxu0 0.0
  %268 = vmatprep.subr.mxu0 0.0
  %269 = vmatpush1.xpose.msra.mxu0 0.0
  %270 = vmatprep.subr.mxu0 0.0
  %271 = vmatpush1.xpose.msra.mxu0 0.0
  %v272 = vand.u32 %v37, 4294901760
  %v273 = vsub.f32 %v37, %v272
  %274 = vmatprep.subr.mxu0 %v273
  %v275 = vand.u32 %v36, 4294901760
  %v276 = vsub.f32 %v36, %v275
  %277 = vmatpush1.xpose.msra.mxu0 %v276
  %v278 = vand.u32 %v35, 4294901760
  %v279 = vsub.f32 %v35, %v278
  %280 = vmatprep.subr.mxu0 %v279
  %v281 = vand.u32 %v34, 4294901760
  %v282 = vsub.f32 %v34, %v281
  %283 = vmatpush1.xpose.msra.mxu0 %v282
  %v284 = vand.u32 %v33, 4294901760
  %v285 = vsub.f32 %v33, %v284
  %286 = vmatprep.subr.mxu0 %v285
  %v287 = vand.u32 %v32, 4294901760
  %v288 = vsub.f32 %v32, %v287
  %289 = vmatpush1.xpose.msra.mxu0 %v288
  %v290 = vand.u32 %v31, 4294901760
  %v291 = vsub.f32 %v31, %v290
  %292 = vmatprep.subr.mxu0 %v291
  %v293 = vand.u32 %v30, 4294901760
  %v294 = vsub.f32 %v30, %v293
  %295 = vmatpush1.xpose.msra.mxu0 %v294
  %v296 = vand.u32 %v29, 4294901760
  %v297 = vsub.f32 %v29, %v296
  %298 = vmatprep.subr.mxu0 %v297
  %v299 = vand.u32 %v28, 4294901760
  %v300 = vsub.f32 %v28, %v299
  %301 = vmatpush1.xpose.msra.mxu0 %v300
  %302 = vmatprep.subr.mxu0 0.0
  %303 = vmatpush2.xpose.msra.mxu0 0.0
  %304 = vmatprep.subr.mxu0 0.0
  %305 = vmatpush2.xpose.msra.mxu0 0.0
  %306 = vmatprep.subr.mxu0 0.0
  %307 = vmatpush2.xpose.msra.mxu0 0.0
  %308 = vmatprep.subr.mxu0 0.0
  %309 = vmatpush2.xpose.msra.mxu0 0.0
  %310 = vmatprep.subr.mxu0 0.0
  %311 = vmatpush2.xpose.msra.mxu0 0.0
  %312 = vmatprep.subr.mxu0 0.0
  %313 = vmatpush2.xpose.msra.mxu0 0.0
  %314 = vmatprep.subr.mxu0 0.0
  %315 = vmatpush2.xpose.msra.mxu0 0.0
  %316 = vmatprep.subr.mxu0 0.0
  %317 = vmatpush2.xpose.msra.mxu0 0.0
  %318 = vmatprep.subr.mxu0 0.0
  %319 = vmatpush2.xpose.msra.mxu0 0.0
  %320 = vmatprep.subr.mxu0 0.0
  %321 = vmatpush2.xpose.msra.mxu0 0.0
  %322 = vmatprep.subr.mxu0 0.0
  %323 = vmatpush2.xpose.msra.mxu0 0.0
  %324 = vmatprep.subr.mxu0 0.0
  %325 = vmatpush2.xpose.msra.mxu0 0.0
  %326 = vmatprep.subr.mxu0 0.0
  %327 = vmatpush2.xpose.msra.mxu0 0.0
  %328 = vmatprep.subr.mxu0 0.0
  %329 = vmatpush2.xpose.msra.mxu0 0.0
  %330 = vmatprep.subr.mxu0 0.0
  %331 = vmatpush2.xpose.msra.mxu0 0.0
  %332 = vmatprep.subr.mxu0 0.0
  %333 = vmatpush2.xpose.msra.mxu0 0.0
  %v334 = vand.u32 %v27, 4294901760
  %v335 = vsub.f32 %v27, %v334
  %336 = vmatprep.mubr.f32.mxu0 %v335
  %v337 = vand.u32 %v26, 4294901760
  %v338 = vsub.f32 %v26, %v337
  %339 = vmatmul.mubr.f32.gmra.mxu0 %v338
  %v340 = vpop.f32.mrf.mxu0
  %v341 = vadd.f32 %v247, %v340
  %v342 = vpop.f32.mrf.mxu0
  %343 = vdwg.mxu0
  %344 = vmatprep.subr.mxu0 0.0
  %345 = vmatpush1.xpose.msra.mxu0 0.0
  %346 = vmatprep.subr.mxu0 0.0
  %347 = vmatpush1.xpose.msra.mxu0 0.0
  %348 = vmatprep.subr.mxu0 0.0
  %349 = vmatpush1.xpose.msra.mxu0 0.0
  %350 = vmatprep.subr.mxu0 0.0
  %351 = vmatpush1.xpose.msra.mxu0 0.0
  %352 = vmatprep.subr.mxu0 0.0
  %353 = vmatpush1.xpose.msra.mxu0 0.0
  %354 = vmatprep.subr.mxu0 0.0
  %355 = vmatpush1.xpose.msra.mxu0 0.0
  %356 = vmatprep.subr.mxu0 0.0
  %357 = vmatpush1.xpose.msra.mxu0 0.0
  %358 = vmatprep.subr.mxu0 0.0
  %359 = vmatpush1.xpose.msra.mxu0 0.0
  %360 = vmatprep.subr.mxu0 0.0
  %361 = vmatpush1.xpose.msra.mxu0 0.0
  %362 = vmatprep.subr.mxu0 0.0
  %363 = vmatpush1.xpose.msra.mxu0 0.0
  %364 = vmatprep.subr.mxu0 0.0
  %365 = vmatpush1.xpose.msra.mxu0 0.0
  %v366 = vand.u32 %v37, 4294901760
  %367 = vmatprep.subr.mxu0 %v366
  %v368 = vand.u32 %v36, 4294901760
  %369 = vmatpush1.xpose.msra.mxu0 %v368
  %v370 = vand.u32 %v35, 4294901760
  %371 = vmatprep.subr.mxu0 %v370
  %v372 = vand.u32 %v34, 4294901760
  %373 = vmatpush1.xpose.msra.mxu0 %v372
  %v374 = vand.u32 %v33, 4294901760
  %375 = vmatprep.subr.mxu0 %v374
  %v376 = vand.u32 %v32, 4294901760
  %377 = vmatpush1.xpose.msra.mxu0 %v376
  %v378 = vand.u32 %v31, 4294901760
  %379 = vmatprep.subr.mxu0 %v378
  %v380 = vand.u32 %v30, 4294901760
  %381 = vmatpush1.xpose.msra.mxu0 %v380
  %v382 = vand.u32 %v29, 4294901760
  %383 = vmatprep.subr.mxu0 %v382
  %v384 = vand.u32 %v28, 4294901760
  %385 = vmatpush1.xpose.msra.mxu0 %v384
  %386 = vmatprep.subr.mxu0 0.0
  %387 = vmatpush2.xpose.msra.mxu0 0.0
  %388 = vmatprep.subr.mxu0 0.0
  %389 = vmatpush2.xpose.msra.mxu0 0.0
  %390 = vmatprep.subr.mxu0 0.0
  %391 = vmatpush2.xpose.msra.mxu0 0.0
  %392 = vmatprep.subr.mxu0 0.0
  %393 = vmatpush2.xpose.msra.mxu0 0.0
  %394 = vmatprep.subr.mxu0 0.0
  %395 = vmatpush2.xpose.msra.mxu0 0.0
  %396 = vmatprep.subr.mxu0 0.0
  %397 = vmatpush2.xpose.msra.mxu0 0.0
  %398 = vmatprep.subr.mxu0 0.0
  %399 = vmatpush2.xpose.msra.mxu0 0.0
  %400 = vmatprep.subr.mxu0 0.0
  %401 = vmatpush2.xpose.msra.mxu0 0.0
  %402 = vmatprep.subr.mxu0 0.0
  %403 = vmatpush2.xpose.msra.mxu0 0.0
  %404 = vmatprep.subr.mxu0 0.0
  %405 = vmatpush2.xpose.msra.mxu0 0.0
  %406 = vmatprep.subr.mxu0 0.0
  %407 = vmatpush2.xpose.msra.mxu0 0.0
  %408 = vmatprep.subr.mxu0 0.0
  %409 = vmatpush2.xpose.msra.mxu0 0.0
  %410 = vmatprep.subr.mxu0 0.0
  %411 = vmatpush2.xpose.msra.mxu0 0.0
  %412 = vmatprep.subr.mxu0 0.0
  %413 = vmatpush2.xpose.msra.mxu0 0.0
  %414 = vmatprep.subr.mxu0 0.0
  %415 = vmatpush2.xpose.msra.mxu0 0.0
  %416 = vmatprep.subr.mxu0 0.0
  %417 = vmatpush2.xpose.msra.mxu0 0.0
  %v418 = vand.u32 %v27, 4294901760
  %v419 = vsub.f32 %v27, %v418
  %v420 = vand.u32 %v419, 4294901760
  %421 = vmatprep.mubr.f32.mxu0 %v420
  %v422 = vand.u32 %v26, 4294901760
  %v423 = vsub.f32 %v26, %v422
  %v424 = vand.u32 %v423, 4294901760
  %425 = vmatmul.mubr.f32.gmra.mxu0 %v424
  %v426 = vpop.f32.mrf.mxu0
  %v427 = vadd.f32 %v341, %v426
  %v428 = vpop.f32.mrf.mxu0
  %429 = vdwg.mxu0
  %430 = vmatprep.subr.mxu0 0.0
  %431 = vmatpush1.xpose.msra.mxu0 0.0
  %432 = vmatprep.subr.mxu0 0.0
  %433 = vmatpush1.xpose.msra.mxu0 0.0
  %434 = vmatprep.subr.mxu0 0.0
  %435 = vmatpush1.xpose.msra.mxu0 0.0
  %436 = vmatprep.subr.mxu0 0.0
  %437 = vmatpush1.xpose.msra.mxu0 0.0
  %438 = vmatprep.subr.mxu0 0.0
  %439 = vmatpush1.xpose.msra.mxu0 0.0
  %440 = vmatprep.subr.mxu0 0.0
  %441 = vmatpush1.xpose.msra.mxu0 0.0
  %442 = vmatprep.subr.mxu0 0.0
  %443 = vmatpush1.xpose.msra.mxu0 0.0
  %444 = vmatprep.subr.mxu0 0.0
  %445 = vmatpush1.xpose.msra.mxu0 0.0
  %446 = vmatprep.subr.mxu0 0.0
  %447 = vmatpush1.xpose.msra.mxu0 0.0
  %448 = vmatprep.subr.mxu0 0.0
  %449 = vmatpush1.xpose.msra.mxu0 0.0
  %450 = vmatprep.subr.mxu0 0.0
  %451 = vmatpush1.xpose.msra.mxu0 0.0
  %v452 = vand.u32 %v37, 4294901760
  %v453 = vsub.f32 %v37, %v452
  %v454 = vand.u32 %v453, 4294901760
  %455 = vmatprep.subr.mxu0 %v454
  %v456 = vand.u32 %v36, 4294901760
  %v457 = vsub.f32 %v36, %v456
  %v458 = vand.u32 %v457, 4294901760
  %459 = vmatpush1.xpose.msra.mxu0 %v458
  %v460 = vand.u32 %v35, 4294901760
  %v461 = vsub.f32 %v35, %v460
  %v462 = vand.u32 %v461, 4294901760
  %463 = vmatprep.subr.mxu0 %v462
  %v464 = vand.u32 %v34, 4294901760
  %v465 = vsub.f32 %v34, %v464
  %v466 = vand.u32 %v465, 4294901760
  %467 = vmatpush1.xpose.msra.mxu0 %v466
  %v468 = vand.u32 %v33, 4294901760
  %v469 = vsub.f32 %v33, %v468
  %v470 = vand.u32 %v469, 4294901760
  %471 = vmatprep.subr.mxu0 %v470
  %v472 = vand.u32 %v32, 4294901760
  %v473 = vsub.f32 %v32, %v472
  %v474 = vand.u32 %v473, 4294901760
  %475 = vmatpush1.xpose.msra.mxu0 %v474
  %v476 = vand.u32 %v31, 4294901760
  %v477 = vsub.f32 %v31, %v476
  %v478 = vand.u32 %v477, 4294901760
  %479 = vmatprep.subr.mxu0 %v478
  %v480 = vand.u32 %v30, 4294901760
  %v481 = vsub.f32 %v30, %v480
  %v482 = vand.u32 %v481, 4294901760
  %483 = vmatpush1.xpose.msra.mxu0 %v482
  %v484 = vand.u32 %v29, 4294901760
  %v485 = vsub.f32 %v29, %v484
  %v486 = vand.u32 %v485, 4294901760
  %487 = vmatprep.subr.mxu0 %v486
  %v488 = vand.u32 %v28, 4294901760
  %v489 = vsub.f32 %v28, %v488
  %v490 = vand.u32 %v489, 4294901760
  %491 = vmatpush1.xpose.msra.mxu0 %v490
  %492 = vmatprep.subr.mxu0 0.0
  %493 = vmatpush2.xpose.msra.mxu0 0.0
  %494 = vmatprep.subr.mxu0 0.0
  %495 = vmatpush2.xpose.msra.mxu0 0.0
  %496 = vmatprep.subr.mxu0 0.0
  %497 = vmatpush2.xpose.msra.mxu0 0.0
  %498 = vmatprep.subr.mxu0 0.0
  %499 = vmatpush2.xpose.msra.mxu0 0.0
  %500 = vmatprep.subr.mxu0 0.0
  %501 = vmatpush2.xpose.msra.mxu0 0.0
  %502 = vmatprep.subr.mxu0 0.0
  %503 = vmatpush2.xpose.msra.mxu0 0.0
  %504 = vmatprep.subr.mxu0 0.0
  %505 = vmatpush2.xpose.msra.mxu0 0.0
  %506 = vmatprep.subr.mxu0 0.0
  %507 = vmatpush2.xpose.msra.mxu0 0.0
  %508 = vmatprep.subr.mxu0 0.0
  %509 = vmatpush2.xpose.msra.mxu0 0.0
  %510 = vmatprep.subr.mxu0 0.0
  %511 = vmatpush2.xpose.msra.mxu0 0.0
  %512 = vmatprep.subr.mxu0 0.0
  %513 = vmatpush2.xpose.msra.mxu0 0.0
  %514 = vmatprep.subr.mxu0 0.0
  %515 = vmatpush2.xpose.msra.mxu0 0.0
  %516 = vmatprep.subr.mxu0 0.0
  %517 = vmatpush2.xpose.msra.mxu0 0.0
  %518 = vmatprep.subr.mxu0 0.0
  %519 = vmatpush2.xpose.msra.mxu0 0.0
  %520 = vmatprep.subr.mxu0 0.0
  %521 = vmatpush2.xpose.msra.mxu0 0.0
  %522 = vmatprep.subr.mxu0 0.0
  %523 = vmatpush2.xpose.msra.mxu0 0.0
  %v524 = vand.u32 %v27, 4294901760
  %525 = vmatprep.mubr.f32.mxu0 %v524
  %v526 = vand.u32 %v26, 4294901760
  %527 = vmatmul.mubr.f32.gmra.mxu0 %v526
  %v528 = vpop.f32.mrf.mxu0
  %v529 = vadd.f32 %v427, %v528
  %v530 = vpop.f32.mrf.mxu0
  %531 = vdwg.mxu0
  %532 = vmatprep.subr.mxu0 0.0
  %533 = vmatpush1.xpose.msra.mxu0 0.0
  %534 = vmatprep.subr.mxu0 0.0
  %535 = vmatpush1.xpose.msra.mxu0 0.0
  %536 = vmatprep.subr.mxu0 0.0
  %537 = vmatpush1.xpose.msra.mxu0 0.0
  %538 = vmatprep.subr.mxu0 0.0
  %539 = vmatpush1.xpose.msra.mxu0 0.0
  %540 = vmatprep.subr.mxu0 0.0
  %541 = vmatpush1.xpose.msra.mxu0 0.0
  %542 = vmatprep.subr.mxu0 0.0
  %543 = vmatpush1.xpose.msra.mxu0 0.0
  %544 = vmatprep.subr.mxu0 0.0
  %545 = vmatpush1.xpose.msra.mxu0 0.0
  %546 = vmatprep.subr.mxu0 0.0
  %547 = vmatpush1.xpose.msra.mxu0 0.0
  %548 = vmatprep.subr.mxu0 0.0
  %549 = vmatpush1.xpose.msra.mxu0 0.0
  %550 = vmatprep.subr.mxu0 0.0
  %551 = vmatpush1.xpose.msra.mxu0 0.0
  %552 = vmatprep.subr.mxu0 0.0
  %553 = vmatpush1.xpose.msra.mxu0 0.0
  %v554 = vand.u32 %v37, 4294901760
  %555 = vmatprep.subr.mxu0 %v554
  %v556 = vand.u32 %v36, 4294901760
  %557 = vmatpush1.xpose.msra.mxu0 %v556
  %v558 = vand.u32 %v35, 4294901760
  %559 = vmatprep.subr.mxu0 %v558
  %v560 = vand.u32 %v34, 4294901760
  %561 = vmatpush1.xpose.msra.mxu0 %v560
  %v562 = vand.u32 %v33, 4294901760
  %563 = vmatprep.subr.mxu0 %v562
  %v564 = vand.u32 %v32, 4294901760
  %565 = vmatpush1.xpose.msra.mxu0 %v564
  %v566 = vand.u32 %v31, 4294901760
  %567 = vmatprep.subr.mxu0 %v566
  %v568 = vand.u32 %v30, 4294901760
  %569 = vmatpush1.xpose.msra.mxu0 %v568
  %v570 = vand.u32 %v29, 4294901760
  %571 = vmatprep.subr.mxu0 %v570
  %v572 = vand.u32 %v28, 4294901760
  %573 = vmatpush1.xpose.msra.mxu0 %v572
  %574 = vmatprep.subr.mxu0 0.0
  %575 = vmatpush2.xpose.msra.mxu0 0.0
  %576 = vmatprep.subr.mxu0 0.0
  %577 = vmatpush2.xpose.msra.mxu0 0.0
  %578 = vmatprep.subr.mxu0 0.0
  %579 = vmatpush2.xpose.msra.mxu0 0.0
  %580 = vmatprep.subr.mxu0 0.0
  %581 = vmatpush2.xpose.msra.mxu0 0.0
  %582 = vmatprep.subr.mxu0 0.0
  %583 = vmatpush2.xpose.msra.mxu0 0.0
  %584 = vmatprep.subr.mxu0 0.0
  %585 = vmatpush2.xpose.msra.mxu0 0.0
  %586 = vmatprep.subr.mxu0 0.0
  %587 = vmatpush2.xpose.msra.mxu0 0.0
  %588 = vmatprep.subr.mxu0 0.0
  %589 = vmatpush2.xpose.msra.mxu0 0.0
  %590 = vmatprep.subr.mxu0 0.0
  %591 = vmatpush2.xpose.msra.mxu0 0.0
  %592 = vmatprep.subr.mxu0 0.0
  %593 = vmatpush2.xpose.msra.mxu0 0.0
  %594 = vmatprep.subr.mxu0 0.0
  %595 = vmatpush2.xpose.msra.mxu0 0.0
  %596 = vmatprep.subr.mxu0 0.0
  %597 = vmatpush2.xpose.msra.mxu0 0.0
  %598 = vmatprep.subr.mxu0 0.0
  %599 = vmatpush2.xpose.msra.mxu0 0.0
  %600 = vmatprep.subr.mxu0 0.0
  %601 = vmatpush2.xpose.msra.mxu0 0.0
  %602 = vmatprep.subr.mxu0 0.0
  %603 = vmatpush2.xpose.msra.mxu0 0.0
  %604 = vmatprep.subr.mxu0 0.0
  %605 = vmatpush2.xpose.msra.mxu0 0.0
  %v606 = vand.u32 %v27, 4294901760
  %607 = vmatprep.mubr.f32.mxu0 %v606
  %v608 = vand.u32 %v26, 4294901760
  %609 = vmatmul.mubr.f32.gmra.mxu0 %v608
  %v610 = vpop.f32.mrf.mxu0
  %v611 = vadd.f32 %v529, %v610
  %v612 = vpop.f32.mrf.mxu0
  %613 = vdwg.mxu0
  %v614 = vmul.f32 %v611, 1.442695
  %v615 = vpow.pop %v614
  %v616 = vand.u32 %v14, 15
  %v617 = vshra.s32 %v14, 4
  %v618 = vcvt.s32.f32 %v616
  %v619 = vlaneseq
  %v620 = vshrl.u32 %v619, 7
  %v621 = vsub.s32 0, %v620
  %v622 = vrot.slane %v618, %v621
  %624 = vbcast.lane.b32.xlu0 %v622, 256
  %v625 = vpop.permute.xlu0 %624
  %v626 = vadd.f32 %v625, %v611
  %v627 = vmul.f32 %v626, 0.4
  %v628 = vadd.f32 %v627, -51.2
  %v629 = vcvt.s32.f32 %v617
  %v630 = vlaneseq
  %v631 = vshrl.u32 %v630, 7
  %v632 = vsub.s32 0, %v631
  %v633 = vrot.slane %v629, %v632
  %635 = vbcast.lane.b32.xlu0 %v633, 256
  %v636 = vpop.permute.xlu0 %635
  %v637 = vadd.f32 %v636, %v611
  %v638 = vmul.f32 %v637, 0.4
  %v639 = vadd.f32 %v638, -51.2
  %vm640 = vcmask 171080
  %v641 = vsel %vm640, %v611, -inf
  %642 = vmax.xlane.f32.xlu0 %v641
  %v643 = vpop.xlane.xlu0 %642
  %vm644 = vcmp.eq.f32.partialorder %v611, %v643
  %645 = vrot.lane.b32.xlu0 %v12, 9
  %v646 = vpop.permute.xlu0 %645
  %v647 = vsel %vm644, %v646, 12
  %v648 = vsel %vm640, %v647, 2147483647
  %v649 = vand.u32 %v648, 65535
  %v650 = vshra.s32 %v648, 16
  %v651 = vcvt.s32.f32 %v649
  %v652 = vcvt.s32.f32 %v650
  %653 = vmin.xlane.f32.xlu0 %v652
  %v654 = vpop.xlane.xlu0 %653
  %vm655 = vcmp.eq.f32.partialorder %v652, %v654
  %v656 = vsel %vm655, %v651, inf
  %657 = vmin.xlane.f32.xlu0 %v656
  %v658 = vpop.xlane.xlu0 %657
  %v659 = vcvt.f32.s32 %v658
  %v660 = vcvt.f32.s32 %v654
  %v661 = vshll.u32 %v660, 16
  %v662 = vadd.s32 %v661, %v659
  %vm663 = vcmp.eq.s32.totalorder %v12, %v662
  %665 = vrot.lane.b32.xlu0 %v611, 107
  %v666 = vpop.permute.xlu0 %665
  %v668 = vsel %vm663, %v666, 0.0
  %vm669 = vcmask 97280
  %v670 = vsel %vm669, %v668, 0.0
  %671 = vadd.xlane.f32.xlu0 %v670
  %v672 = vpop.xlane.xlu0 %671
  %v673 = vmul.f32 %v672, 0.2617994
  %v674 = vcvt.s32.f32 %v662
  %v675 = vmul.f32 %v674, 0.5235988
  %v676 = vadd.f32 %v675, %v673
  %vm677 = vcmp.gt.f32.partialorder %v676, 3.1415927
  %v678 = vsub.f32 %v676, 6.2831855
  %v679 = vsel %vm677, %v678, %v676
  %v680 = vxor.u32 %v611, 2147483648
  %v681 = vmul.f32 %v680, 1.442695
  %v682 = vpow.pop %v681
  %v683 = vadd.f32 %v682, 1.0
  %v684 = vrcp.pop %v683
  %v685 = vmul.f32 1.0, %v684
  %vm686 = vcmask 23552
  %v687 = vsel %vm686, %v685, -inf
  %688 = vmax.xlane.f32.xlu0 %v687
  %v689 = vpop.xlane.xlu0 %688
  %691 = vrot.lane.b32.xlu0 %v628, 125
  %v692 = vpop.permute.xlu0 %691
  %695 = vrot.lane.b32.xlu0 %v639, 125
  %v696 = vpop.permute.xlu0 %695
  %698 = vrot.lane.b32.xlu0 %v611, 125
  %v699 = vpop.permute.xlu0 %698
  %702 = vrot.lane.b32.xlu0 %v615, 125
  %v703 = vpop.permute.xlu0 %702
  %706 = vrot.lane.b32.xlu0 %v685, 7
  %v707 = vpop.permute.xlu0 %706
  %vm709 = vcmask 7168
  %v710 = vsel %vm709, %v692, %v696
  %vm711 = vcmask 15360
  %v712 = vsel %vm711, %v710, %v699
  %v713 = vsel %vm686, %v712, %v703
  %vm714 = vcmask 48128
  %v715 = vsel %vm714, %v713, %v679
  %vm716 = vcmask 56320
  %v717 = vsel %vm716, %v715, %v707
  %vm718 = vcmask 80896
  %v719 = vsel %vm718, %v717, %v689
  %vm720 = vcmask 89088
  %721 = vst.msk [vmem:[%s2] sm:$0xff] %vm720, %v719
  %v722 = vld [vmem:[%s0 + $0x1] sm:$0x1]
  %v723 = vlaneseq
  %v724 = vshrl.u32 %v723, 7
  %v725 = vsub.s32 0, %v724
  %v726 = vrot.slane %v722, %v725
  %728 = vbcast.lane.b32.xlu0 %v726, 256
  %v729 = vpop.permute.xlu0 %728
  %vm730 = vcmp.eq.s32.totalorder %v12, %v729
  %vm731 = vcmp.eq.s32.totalorder %v13, %v729
  %v732 = vsel %vm730, 1, 0
  %v733 = vsel %vm731, 1, 0
  %v734 = vcvt.s32.f32 %v732
  %v735 = vcvt.s32.f32 %v733
  %s736 = scalar_lea.vmem %s1, 80
  %v737 = vld [vmem:[%s736] sm:$0xff]
  %v738 = vld [vmem:[%s736 + $0x8] sm:$0xff]
  %v739 = vld [vmem:[%s736 + $0x10] sm:$0xff]
  %v740 = vld [vmem:[%s736 + $0x18] sm:$0xff]
  %v741 = vld [vmem:[%s736 + $0x20] sm:$0xff]
  %v742 = vld [vmem:[%s736 + $0x28] sm:$0xff]
  %v743 = vld [vmem:[%s736 + $0x30] sm:$0xff]
  %v744 = vld [vmem:[%s736 + $0x38] sm:$0xff]
  %v745 = vld [vmem:[%s736 + $0x40] sm:$0x1]
  %v746 = vld [vmem:[%s736 + $0x48] sm:$0x1]
  %747 = vmatprep.subr.mxu0 0.0
  %748 = vmatpush1.xpose.msra.mxu0 0.0
  %749 = vmatprep.subr.mxu0 0.0
  %750 = vmatpush1.xpose.msra.mxu0 0.0
  %751 = vmatprep.subr.mxu0 0.0
  %752 = vmatpush1.xpose.msra.mxu0 0.0
  %753 = vmatprep.subr.mxu0 0.0
  %754 = vmatpush1.xpose.msra.mxu0 0.0
  %755 = vmatprep.subr.mxu0 0.0
  %756 = vmatpush1.xpose.msra.mxu0 0.0
  %757 = vmatprep.subr.mxu0 0.0
  %758 = vmatpush1.xpose.msra.mxu0 0.0
  %759 = vmatprep.subr.mxu0 0.0
  %760 = vmatpush1.xpose.msra.mxu0 0.0
  %761 = vmatprep.subr.mxu0 0.0
  %762 = vmatpush1.xpose.msra.mxu0 0.0
  %763 = vmatprep.subr.mxu0 0.0
  %764 = vmatpush1.xpose.msra.mxu0 0.0
  %765 = vmatprep.subr.mxu0 0.0
  %766 = vmatpush1.xpose.msra.mxu0 0.0
  %767 = vmatprep.subr.mxu0 0.0
  %768 = vmatpush1.xpose.msra.mxu0 0.0
  %v769 = vand.u32 %v746, 4294901760
  %770 = vmatprep.subr.mxu0 %v769
  %v771 = vand.u32 %v745, 4294901760
  %772 = vmatpush1.xpose.msra.mxu0 %v771
  %v773 = vand.u32 %v744, 4294901760
  %774 = vmatprep.subr.mxu0 %v773
  %v775 = vand.u32 %v743, 4294901760
  %776 = vmatpush1.xpose.msra.mxu0 %v775
  %v777 = vand.u32 %v742, 4294901760
  %778 = vmatprep.subr.mxu0 %v777
  %v779 = vand.u32 %v741, 4294901760
  %780 = vmatpush1.xpose.msra.mxu0 %v779
  %v781 = vand.u32 %v740, 4294901760
  %782 = vmatprep.subr.mxu0 %v781
  %v783 = vand.u32 %v739, 4294901760
  %784 = vmatpush1.xpose.msra.mxu0 %v783
  %v785 = vand.u32 %v738, 4294901760
  %786 = vmatprep.subr.mxu0 %v785
  %v787 = vand.u32 %v737, 4294901760
  %788 = vmatpush1.xpose.msra.mxu0 %v787
  %789 = vmatprep.subr.mxu0 0.0
  %790 = vmatpush2.xpose.msra.mxu0 0.0
  %791 = vmatprep.subr.mxu0 0.0
  %792 = vmatpush2.xpose.msra.mxu0 0.0
  %793 = vmatprep.subr.mxu0 0.0
  %794 = vmatpush2.xpose.msra.mxu0 0.0
  %795 = vmatprep.subr.mxu0 0.0
  %796 = vmatpush2.xpose.msra.mxu0 0.0
  %797 = vmatprep.subr.mxu0 0.0
  %798 = vmatpush2.xpose.msra.mxu0 0.0
  %799 = vmatprep.subr.mxu0 0.0
  %800 = vmatpush2.xpose.msra.mxu0 0.0
  %801 = vmatprep.subr.mxu0 0.0
  %802 = vmatpush2.xpose.msra.mxu0 0.0
  %803 = vmatprep.subr.mxu0 0.0
  %804 = vmatpush2.xpose.msra.mxu0 0.0
  %805 = vmatprep.subr.mxu0 0.0
  %806 = vmatpush2.xpose.msra.mxu0 0.0
  %807 = vmatprep.subr.mxu0 0.0
  %808 = vmatpush2.xpose.msra.mxu0 0.0
  %809 = vmatprep.subr.mxu0 0.0
  %810 = vmatpush2.xpose.msra.mxu0 0.0
  %811 = vmatprep.subr.mxu0 0.0
  %812 = vmatpush2.xpose.msra.mxu0 0.0
  %813 = vmatprep.subr.mxu0 0.0
  %814 = vmatpush2.xpose.msra.mxu0 0.0
  %815 = vmatprep.subr.mxu0 0.0
  %816 = vmatpush2.xpose.msra.mxu0 0.0
  %817 = vmatprep.subr.mxu0 0.0
  %818 = vmatpush2.xpose.msra.mxu0 0.0
  %819 = vmatprep.subr.mxu0 0.0
  %820 = vmatpush2.xpose.msra.mxu0 0.0
  %v821 = vand.u32 %v735, 4294901760
  %v822 = vsub.f32 %v735, %v821
  %v823 = vand.u32 %v822, 4294901760
  %v824 = vsub.f32 %v822, %v823
  %v825 = vand.u32 %v824, 4294901760
  %826 = vmatprep.mubr.f32.mxu0 %v825
  %v827 = vand.u32 %v734, 4294901760
  %v828 = vsub.f32 %v734, %v827
  %v829 = vand.u32 %v828, 4294901760
  %v830 = vsub.f32 %v828, %v829
  %v831 = vand.u32 %v830, 4294901760
  %832 = vmatmul.mubr.f32.gmra.mxu0 %v831
  %v833 = vpop.f32.mrf.mxu0
  %v834 = vadd.f32 0.0, %v833
  %v835 = vpop.f32.mrf.mxu0
  %836 = vdwg.mxu0
  %837 = vmatprep.subr.mxu0 0.0
  %838 = vmatpush1.xpose.msra.mxu0 0.0
  %839 = vmatprep.subr.mxu0 0.0
  %840 = vmatpush1.xpose.msra.mxu0 0.0
  %841 = vmatprep.subr.mxu0 0.0
  %842 = vmatpush1.xpose.msra.mxu0 0.0
  %843 = vmatprep.subr.mxu0 0.0
  %844 = vmatpush1.xpose.msra.mxu0 0.0
  %845 = vmatprep.subr.mxu0 0.0
  %846 = vmatpush1.xpose.msra.mxu0 0.0
  %847 = vmatprep.subr.mxu0 0.0
  %848 = vmatpush1.xpose.msra.mxu0 0.0
  %849 = vmatprep.subr.mxu0 0.0
  %850 = vmatpush1.xpose.msra.mxu0 0.0
  %851 = vmatprep.subr.mxu0 0.0
  %852 = vmatpush1.xpose.msra.mxu0 0.0
  %853 = vmatprep.subr.mxu0 0.0
  %854 = vmatpush1.xpose.msra.mxu0 0.0
  %855 = vmatprep.subr.mxu0 0.0
  %856 = vmatpush1.xpose.msra.mxu0 0.0
  %857 = vmatprep.subr.mxu0 0.0
  %858 = vmatpush1.xpose.msra.mxu0 0.0
  %v859 = vand.u32 %v746, 4294901760
  %v860 = vsub.f32 %v746, %v859
  %v861 = vand.u32 %v860, 4294901760
  %v862 = vsub.f32 %v860, %v861
  %v863 = vand.u32 %v862, 4294901760
  %864 = vmatprep.subr.mxu0 %v863
  %v865 = vand.u32 %v745, 4294901760
  %v866 = vsub.f32 %v745, %v865
  %v867 = vand.u32 %v866, 4294901760
  %v868 = vsub.f32 %v866, %v867
  %v869 = vand.u32 %v868, 4294901760
  %870 = vmatpush1.xpose.msra.mxu0 %v869
  %v871 = vand.u32 %v744, 4294901760
  %v872 = vsub.f32 %v744, %v871
  %v873 = vand.u32 %v872, 4294901760
  %v874 = vsub.f32 %v872, %v873
  %v875 = vand.u32 %v874, 4294901760
  %876 = vmatprep.subr.mxu0 %v875
  %v877 = vand.u32 %v743, 4294901760
  %v878 = vsub.f32 %v743, %v877
  %v879 = vand.u32 %v878, 4294901760
  %v880 = vsub.f32 %v878, %v879
  %v881 = vand.u32 %v880, 4294901760
  %882 = vmatpush1.xpose.msra.mxu0 %v881
  %v883 = vand.u32 %v742, 4294901760
  %v884 = vsub.f32 %v742, %v883
  %v885 = vand.u32 %v884, 4294901760
  %v886 = vsub.f32 %v884, %v885
  %v887 = vand.u32 %v886, 4294901760
  %888 = vmatprep.subr.mxu0 %v887
  %v889 = vand.u32 %v741, 4294901760
  %v890 = vsub.f32 %v741, %v889
  %v891 = vand.u32 %v890, 4294901760
  %v892 = vsub.f32 %v890, %v891
  %v893 = vand.u32 %v892, 4294901760
  %894 = vmatpush1.xpose.msra.mxu0 %v893
  %v895 = vand.u32 %v740, 4294901760
  %v896 = vsub.f32 %v740, %v895
  %v897 = vand.u32 %v896, 4294901760
  %v898 = vsub.f32 %v896, %v897
  %v899 = vand.u32 %v898, 4294901760
  %900 = vmatprep.subr.mxu0 %v899
  %v901 = vand.u32 %v739, 4294901760
  %v902 = vsub.f32 %v739, %v901
  %v903 = vand.u32 %v902, 4294901760
  %v904 = vsub.f32 %v902, %v903
  %v905 = vand.u32 %v904, 4294901760
  %906 = vmatpush1.xpose.msra.mxu0 %v905
  %v907 = vand.u32 %v738, 4294901760
  %v908 = vsub.f32 %v738, %v907
  %v909 = vand.u32 %v908, 4294901760
  %v910 = vsub.f32 %v908, %v909
  %v911 = vand.u32 %v910, 4294901760
  %912 = vmatprep.subr.mxu0 %v911
  %v913 = vand.u32 %v737, 4294901760
  %v914 = vsub.f32 %v737, %v913
  %v915 = vand.u32 %v914, 4294901760
  %v916 = vsub.f32 %v914, %v915
  %v917 = vand.u32 %v916, 4294901760
  %918 = vmatpush1.xpose.msra.mxu0 %v917
  %919 = vmatprep.subr.mxu0 0.0
  %920 = vmatpush2.xpose.msra.mxu0 0.0
  %921 = vmatprep.subr.mxu0 0.0
  %922 = vmatpush2.xpose.msra.mxu0 0.0
  %923 = vmatprep.subr.mxu0 0.0
  %924 = vmatpush2.xpose.msra.mxu0 0.0
  %925 = vmatprep.subr.mxu0 0.0
  %926 = vmatpush2.xpose.msra.mxu0 0.0
  %927 = vmatprep.subr.mxu0 0.0
  %928 = vmatpush2.xpose.msra.mxu0 0.0
  %929 = vmatprep.subr.mxu0 0.0
  %930 = vmatpush2.xpose.msra.mxu0 0.0
  %931 = vmatprep.subr.mxu0 0.0
  %932 = vmatpush2.xpose.msra.mxu0 0.0
  %933 = vmatprep.subr.mxu0 0.0
  %934 = vmatpush2.xpose.msra.mxu0 0.0
  %935 = vmatprep.subr.mxu0 0.0
  %936 = vmatpush2.xpose.msra.mxu0 0.0
  %937 = vmatprep.subr.mxu0 0.0
  %938 = vmatpush2.xpose.msra.mxu0 0.0
  %939 = vmatprep.subr.mxu0 0.0
  %940 = vmatpush2.xpose.msra.mxu0 0.0
  %941 = vmatprep.subr.mxu0 0.0
  %942 = vmatpush2.xpose.msra.mxu0 0.0
  %943 = vmatprep.subr.mxu0 0.0
  %944 = vmatpush2.xpose.msra.mxu0 0.0
  %945 = vmatprep.subr.mxu0 0.0
  %946 = vmatpush2.xpose.msra.mxu0 0.0
  %947 = vmatprep.subr.mxu0 0.0
  %948 = vmatpush2.xpose.msra.mxu0 0.0
  %949 = vmatprep.subr.mxu0 0.0
  %950 = vmatpush2.xpose.msra.mxu0 0.0
  %v951 = vand.u32 %v735, 4294901760
  %952 = vmatprep.mubr.f32.mxu0 %v951
  %v953 = vand.u32 %v734, 4294901760
  %954 = vmatmul.mubr.f32.gmra.mxu0 %v953
  %v955 = vpop.f32.mrf.mxu0
  %v956 = vadd.f32 %v834, %v955
  %v957 = vpop.f32.mrf.mxu0
  %958 = vdwg.mxu0
  %959 = vmatprep.subr.mxu0 0.0
  %960 = vmatpush1.xpose.msra.mxu0 0.0
  %961 = vmatprep.subr.mxu0 0.0
  %962 = vmatpush1.xpose.msra.mxu0 0.0
  %963 = vmatprep.subr.mxu0 0.0
  %964 = vmatpush1.xpose.msra.mxu0 0.0
  %965 = vmatprep.subr.mxu0 0.0
  %966 = vmatpush1.xpose.msra.mxu0 0.0
  %967 = vmatprep.subr.mxu0 0.0
  %968 = vmatpush1.xpose.msra.mxu0 0.0
  %969 = vmatprep.subr.mxu0 0.0
  %970 = vmatpush1.xpose.msra.mxu0 0.0
  %971 = vmatprep.subr.mxu0 0.0
  %972 = vmatpush1.xpose.msra.mxu0 0.0
  %973 = vmatprep.subr.mxu0 0.0
  %974 = vmatpush1.xpose.msra.mxu0 0.0
  %975 = vmatprep.subr.mxu0 0.0
  %976 = vmatpush1.xpose.msra.mxu0 0.0
  %977 = vmatprep.subr.mxu0 0.0
  %978 = vmatpush1.xpose.msra.mxu0 0.0
  %979 = vmatprep.subr.mxu0 0.0
  %980 = vmatpush1.xpose.msra.mxu0 0.0
  %v981 = vand.u32 %v746, 4294901760
  %v982 = vsub.f32 %v746, %v981
  %983 = vmatprep.subr.mxu0 %v982
  %v984 = vand.u32 %v745, 4294901760
  %v985 = vsub.f32 %v745, %v984
  %986 = vmatpush1.xpose.msra.mxu0 %v985
  %v987 = vand.u32 %v744, 4294901760
  %v988 = vsub.f32 %v744, %v987
  %989 = vmatprep.subr.mxu0 %v988
  %v990 = vand.u32 %v743, 4294901760
  %v991 = vsub.f32 %v743, %v990
  %992 = vmatpush1.xpose.msra.mxu0 %v991
  %v993 = vand.u32 %v742, 4294901760
  %v994 = vsub.f32 %v742, %v993
  %995 = vmatprep.subr.mxu0 %v994
  %v996 = vand.u32 %v741, 4294901760
  %v997 = vsub.f32 %v741, %v996
  %998 = vmatpush1.xpose.msra.mxu0 %v997
  %v999 = vand.u32 %v740, 4294901760
  %v1000 = vsub.f32 %v740, %v999
  %1001 = vmatprep.subr.mxu0 %v1000
  %v1002 = vand.u32 %v739, 4294901760
  %v1003 = vsub.f32 %v739, %v1002
  %1004 = vmatpush1.xpose.msra.mxu0 %v1003
  %v1005 = vand.u32 %v738, 4294901760
  %v1006 = vsub.f32 %v738, %v1005
  %1007 = vmatprep.subr.mxu0 %v1006
  %v1008 = vand.u32 %v737, 4294901760
  %v1009 = vsub.f32 %v737, %v1008
  %1010 = vmatpush1.xpose.msra.mxu0 %v1009
  %1011 = vmatprep.subr.mxu0 0.0
  %1012 = vmatpush2.xpose.msra.mxu0 0.0
  %1013 = vmatprep.subr.mxu0 0.0
  %1014 = vmatpush2.xpose.msra.mxu0 0.0
  %1015 = vmatprep.subr.mxu0 0.0
  %1016 = vmatpush2.xpose.msra.mxu0 0.0
  %1017 = vmatprep.subr.mxu0 0.0
  %1018 = vmatpush2.xpose.msra.mxu0 0.0
  %1019 = vmatprep.subr.mxu0 0.0
  %1020 = vmatpush2.xpose.msra.mxu0 0.0
  %1021 = vmatprep.subr.mxu0 0.0
  %1022 = vmatpush2.xpose.msra.mxu0 0.0
  %1023 = vmatprep.subr.mxu0 0.0
  %1024 = vmatpush2.xpose.msra.mxu0 0.0
  %1025 = vmatprep.subr.mxu0 0.0
  %1026 = vmatpush2.xpose.msra.mxu0 0.0
  %1027 = vmatprep.subr.mxu0 0.0
  %1028 = vmatpush2.xpose.msra.mxu0 0.0
  %1029 = vmatprep.subr.mxu0 0.0
  %1030 = vmatpush2.xpose.msra.mxu0 0.0
  %1031 = vmatprep.subr.mxu0 0.0
  %1032 = vmatpush2.xpose.msra.mxu0 0.0
  %1033 = vmatprep.subr.mxu0 0.0
  %1034 = vmatpush2.xpose.msra.mxu0 0.0
  %1035 = vmatprep.subr.mxu0 0.0
  %1036 = vmatpush2.xpose.msra.mxu0 0.0
  %1037 = vmatprep.subr.mxu0 0.0
  %1038 = vmatpush2.xpose.msra.mxu0 0.0
  %1039 = vmatprep.subr.mxu0 0.0
  %1040 = vmatpush2.xpose.msra.mxu0 0.0
  %1041 = vmatprep.subr.mxu0 0.0
  %1042 = vmatpush2.xpose.msra.mxu0 0.0
  %v1043 = vand.u32 %v735, 4294901760
  %v1044 = vsub.f32 %v735, %v1043
  %1045 = vmatprep.mubr.f32.mxu0 %v1044
  %v1046 = vand.u32 %v734, 4294901760
  %v1047 = vsub.f32 %v734, %v1046
  %1048 = vmatmul.mubr.f32.gmra.mxu0 %v1047
  %v1049 = vpop.f32.mrf.mxu0
  %v1050 = vadd.f32 %v956, %v1049
  %v1051 = vpop.f32.mrf.mxu0
  %1052 = vdwg.mxu0
  %1053 = vmatprep.subr.mxu0 0.0
  %1054 = vmatpush1.xpose.msra.mxu0 0.0
  %1055 = vmatprep.subr.mxu0 0.0
  %1056 = vmatpush1.xpose.msra.mxu0 0.0
  %1057 = vmatprep.subr.mxu0 0.0
  %1058 = vmatpush1.xpose.msra.mxu0 0.0
  %1059 = vmatprep.subr.mxu0 0.0
  %1060 = vmatpush1.xpose.msra.mxu0 0.0
  %1061 = vmatprep.subr.mxu0 0.0
  %1062 = vmatpush1.xpose.msra.mxu0 0.0
  %1063 = vmatprep.subr.mxu0 0.0
  %1064 = vmatpush1.xpose.msra.mxu0 0.0
  %1065 = vmatprep.subr.mxu0 0.0
  %1066 = vmatpush1.xpose.msra.mxu0 0.0
  %1067 = vmatprep.subr.mxu0 0.0
  %1068 = vmatpush1.xpose.msra.mxu0 0.0
  %1069 = vmatprep.subr.mxu0 0.0
  %1070 = vmatpush1.xpose.msra.mxu0 0.0
  %1071 = vmatprep.subr.mxu0 0.0
  %1072 = vmatpush1.xpose.msra.mxu0 0.0
  %1073 = vmatprep.subr.mxu0 0.0
  %1074 = vmatpush1.xpose.msra.mxu0 0.0
  %v1075 = vand.u32 %v746, 4294901760
  %1076 = vmatprep.subr.mxu0 %v1075
  %v1077 = vand.u32 %v745, 4294901760
  %1078 = vmatpush1.xpose.msra.mxu0 %v1077
  %v1079 = vand.u32 %v744, 4294901760
  %1080 = vmatprep.subr.mxu0 %v1079
  %v1081 = vand.u32 %v743, 4294901760
  %1082 = vmatpush1.xpose.msra.mxu0 %v1081
  %v1083 = vand.u32 %v742, 4294901760
  %1084 = vmatprep.subr.mxu0 %v1083
  %v1085 = vand.u32 %v741, 4294901760
  %1086 = vmatpush1.xpose.msra.mxu0 %v1085
  %v1087 = vand.u32 %v740, 4294901760
  %1088 = vmatprep.subr.mxu0 %v1087
  %v1089 = vand.u32 %v739, 4294901760
  %1090 = vmatpush1.xpose.msra.mxu0 %v1089
  %v1091 = vand.u32 %v738, 4294901760
  %1092 = vmatprep.subr.mxu0 %v1091
  %v1093 = vand.u32 %v737, 4294901760
  %1094 = vmatpush1.xpose.msra.mxu0 %v1093
  %1095 = vmatprep.subr.mxu0 0.0
  %1096 = vmatpush2.xpose.msra.mxu0 0.0
  %1097 = vmatprep.subr.mxu0 0.0
  %1098 = vmatpush2.xpose.msra.mxu0 0.0
  %1099 = vmatprep.subr.mxu0 0.0
  %1100 = vmatpush2.xpose.msra.mxu0 0.0
  %1101 = vmatprep.subr.mxu0 0.0
  %1102 = vmatpush2.xpose.msra.mxu0 0.0
  %1103 = vmatprep.subr.mxu0 0.0
  %1104 = vmatpush2.xpose.msra.mxu0 0.0
  %1105 = vmatprep.subr.mxu0 0.0
  %1106 = vmatpush2.xpose.msra.mxu0 0.0
  %1107 = vmatprep.subr.mxu0 0.0
  %1108 = vmatpush2.xpose.msra.mxu0 0.0
  %1109 = vmatprep.subr.mxu0 0.0
  %1110 = vmatpush2.xpose.msra.mxu0 0.0
  %1111 = vmatprep.subr.mxu0 0.0
  %1112 = vmatpush2.xpose.msra.mxu0 0.0
  %1113 = vmatprep.subr.mxu0 0.0
  %1114 = vmatpush2.xpose.msra.mxu0 0.0
  %1115 = vmatprep.subr.mxu0 0.0
  %1116 = vmatpush2.xpose.msra.mxu0 0.0
  %1117 = vmatprep.subr.mxu0 0.0
  %1118 = vmatpush2.xpose.msra.mxu0 0.0
  %1119 = vmatprep.subr.mxu0 0.0
  %1120 = vmatpush2.xpose.msra.mxu0 0.0
  %1121 = vmatprep.subr.mxu0 0.0
  %1122 = vmatpush2.xpose.msra.mxu0 0.0
  %1123 = vmatprep.subr.mxu0 0.0
  %1124 = vmatpush2.xpose.msra.mxu0 0.0
  %1125 = vmatprep.subr.mxu0 0.0
  %1126 = vmatpush2.xpose.msra.mxu0 0.0
  %v1127 = vand.u32 %v735, 4294901760
  %v1128 = vsub.f32 %v735, %v1127
  %v1129 = vand.u32 %v1128, 4294901760
  %1130 = vmatprep.mubr.f32.mxu0 %v1129
  %v1131 = vand.u32 %v734, 4294901760
  %v1132 = vsub.f32 %v734, %v1131
  %v1133 = vand.u32 %v1132, 4294901760
  %1134 = vmatmul.mubr.f32.gmra.mxu0 %v1133
  %v1135 = vpop.f32.mrf.mxu0
  %v1136 = vadd.f32 %v1050, %v1135
  %v1137 = vpop.f32.mrf.mxu0
  %1138 = vdwg.mxu0
  %1139 = vmatprep.subr.mxu0 0.0
  %1140 = vmatpush1.xpose.msra.mxu0 0.0
  %1141 = vmatprep.subr.mxu0 0.0
  %1142 = vmatpush1.xpose.msra.mxu0 0.0
  %1143 = vmatprep.subr.mxu0 0.0
  %1144 = vmatpush1.xpose.msra.mxu0 0.0
  %1145 = vmatprep.subr.mxu0 0.0
  %1146 = vmatpush1.xpose.msra.mxu0 0.0
  %1147 = vmatprep.subr.mxu0 0.0
  %1148 = vmatpush1.xpose.msra.mxu0 0.0
  %1149 = vmatprep.subr.mxu0 0.0
  %1150 = vmatpush1.xpose.msra.mxu0 0.0
  %1151 = vmatprep.subr.mxu0 0.0
  %1152 = vmatpush1.xpose.msra.mxu0 0.0
  %1153 = vmatprep.subr.mxu0 0.0
  %1154 = vmatpush1.xpose.msra.mxu0 0.0
  %1155 = vmatprep.subr.mxu0 0.0
  %1156 = vmatpush1.xpose.msra.mxu0 0.0
  %1157 = vmatprep.subr.mxu0 0.0
  %1158 = vmatpush1.xpose.msra.mxu0 0.0
  %1159 = vmatprep.subr.mxu0 0.0
  %1160 = vmatpush1.xpose.msra.mxu0 0.0
  %v1161 = vand.u32 %v746, 4294901760
  %v1162 = vsub.f32 %v746, %v1161
  %v1163 = vand.u32 %v1162, 4294901760
  %1164 = vmatprep.subr.mxu0 %v1163
  %v1165 = vand.u32 %v745, 4294901760
  %v1166 = vsub.f32 %v745, %v1165
  %v1167 = vand.u32 %v1166, 4294901760
  %1168 = vmatpush1.xpose.msra.mxu0 %v1167
  %v1169 = vand.u32 %v744, 4294901760
  %v1170 = vsub.f32 %v744, %v1169
  %v1171 = vand.u32 %v1170, 4294901760
  %1172 = vmatprep.subr.mxu0 %v1171
  %v1173 = vand.u32 %v743, 4294901760
  %v1174 = vsub.f32 %v743, %v1173
  %v1175 = vand.u32 %v1174, 4294901760
  %1176 = vmatpush1.xpose.msra.mxu0 %v1175
  %v1177 = vand.u32 %v742, 4294901760
  %v1178 = vsub.f32 %v742, %v1177
  %v1179 = vand.u32 %v1178, 4294901760
  %1180 = vmatprep.subr.mxu0 %v1179
  %v1181 = vand.u32 %v741, 4294901760
  %v1182 = vsub.f32 %v741, %v1181
  %v1183 = vand.u32 %v1182, 4294901760
  %1184 = vmatpush1.xpose.msra.mxu0 %v1183
  %v1185 = vand.u32 %v740, 4294901760
  %v1186 = vsub.f32 %v740, %v1185
  %v1187 = vand.u32 %v1186, 4294901760
  %1188 = vmatprep.subr.mxu0 %v1187
  %v1189 = vand.u32 %v739, 4294901760
  %v1190 = vsub.f32 %v739, %v1189
  %v1191 = vand.u32 %v1190, 4294901760
  %1192 = vmatpush1.xpose.msra.mxu0 %v1191
  %v1193 = vand.u32 %v738, 4294901760
  %v1194 = vsub.f32 %v738, %v1193
  %v1195 = vand.u32 %v1194, 4294901760
  %1196 = vmatprep.subr.mxu0 %v1195
  %v1197 = vand.u32 %v737, 4294901760
  %v1198 = vsub.f32 %v737, %v1197
  %v1199 = vand.u32 %v1198, 4294901760
  %1200 = vmatpush1.xpose.msra.mxu0 %v1199
  %1201 = vmatprep.subr.mxu0 0.0
  %1202 = vmatpush2.xpose.msra.mxu0 0.0
  %1203 = vmatprep.subr.mxu0 0.0
  %1204 = vmatpush2.xpose.msra.mxu0 0.0
  %1205 = vmatprep.subr.mxu0 0.0
  %1206 = vmatpush2.xpose.msra.mxu0 0.0
  %1207 = vmatprep.subr.mxu0 0.0
  %1208 = vmatpush2.xpose.msra.mxu0 0.0
  %1209 = vmatprep.subr.mxu0 0.0
  %1210 = vmatpush2.xpose.msra.mxu0 0.0
  %1211 = vmatprep.subr.mxu0 0.0
  %1212 = vmatpush2.xpose.msra.mxu0 0.0
  %1213 = vmatprep.subr.mxu0 0.0
  %1214 = vmatpush2.xpose.msra.mxu0 0.0
  %1215 = vmatprep.subr.mxu0 0.0
  %1216 = vmatpush2.xpose.msra.mxu0 0.0
  %1217 = vmatprep.subr.mxu0 0.0
  %1218 = vmatpush2.xpose.msra.mxu0 0.0
  %1219 = vmatprep.subr.mxu0 0.0
  %1220 = vmatpush2.xpose.msra.mxu0 0.0
  %1221 = vmatprep.subr.mxu0 0.0
  %1222 = vmatpush2.xpose.msra.mxu0 0.0
  %1223 = vmatprep.subr.mxu0 0.0
  %1224 = vmatpush2.xpose.msra.mxu0 0.0
  %1225 = vmatprep.subr.mxu0 0.0
  %1226 = vmatpush2.xpose.msra.mxu0 0.0
  %1227 = vmatprep.subr.mxu0 0.0
  %1228 = vmatpush2.xpose.msra.mxu0 0.0
  %1229 = vmatprep.subr.mxu0 0.0
  %1230 = vmatpush2.xpose.msra.mxu0 0.0
  %1231 = vmatprep.subr.mxu0 0.0
  %1232 = vmatpush2.xpose.msra.mxu0 0.0
  %v1233 = vand.u32 %v735, 4294901760
  %1234 = vmatprep.mubr.f32.mxu0 %v1233
  %v1235 = vand.u32 %v734, 4294901760
  %1236 = vmatmul.mubr.f32.gmra.mxu0 %v1235
  %v1237 = vpop.f32.mrf.mxu0
  %v1238 = vadd.f32 %v1136, %v1237
  %v1239 = vpop.f32.mrf.mxu0
  %1240 = vdwg.mxu0
  %1241 = vmatprep.subr.mxu0 0.0
  %1242 = vmatpush1.xpose.msra.mxu0 0.0
  %1243 = vmatprep.subr.mxu0 0.0
  %1244 = vmatpush1.xpose.msra.mxu0 0.0
  %1245 = vmatprep.subr.mxu0 0.0
  %1246 = vmatpush1.xpose.msra.mxu0 0.0
  %1247 = vmatprep.subr.mxu0 0.0
  %1248 = vmatpush1.xpose.msra.mxu0 0.0
  %1249 = vmatprep.subr.mxu0 0.0
  %1250 = vmatpush1.xpose.msra.mxu0 0.0
  %1251 = vmatprep.subr.mxu0 0.0
  %1252 = vmatpush1.xpose.msra.mxu0 0.0
  %1253 = vmatprep.subr.mxu0 0.0
  %1254 = vmatpush1.xpose.msra.mxu0 0.0
  %1255 = vmatprep.subr.mxu0 0.0
  %1256 = vmatpush1.xpose.msra.mxu0 0.0
  %1257 = vmatprep.subr.mxu0 0.0
  %1258 = vmatpush1.xpose.msra.mxu0 0.0
  %1259 = vmatprep.subr.mxu0 0.0
  %1260 = vmatpush1.xpose.msra.mxu0 0.0
  %1261 = vmatprep.subr.mxu0 0.0
  %1262 = vmatpush1.xpose.msra.mxu0 0.0
  %v1263 = vand.u32 %v746, 4294901760
  %1264 = vmatprep.subr.mxu0 %v1263
  %v1265 = vand.u32 %v745, 4294901760
  %1266 = vmatpush1.xpose.msra.mxu0 %v1265
  %v1267 = vand.u32 %v744, 4294901760
  %1268 = vmatprep.subr.mxu0 %v1267
  %v1269 = vand.u32 %v743, 4294901760
  %1270 = vmatpush1.xpose.msra.mxu0 %v1269
  %v1271 = vand.u32 %v742, 4294901760
  %1272 = vmatprep.subr.mxu0 %v1271
  %v1273 = vand.u32 %v741, 4294901760
  %1274 = vmatpush1.xpose.msra.mxu0 %v1273
  %v1275 = vand.u32 %v740, 4294901760
  %1276 = vmatprep.subr.mxu0 %v1275
  %v1277 = vand.u32 %v739, 4294901760
  %1278 = vmatpush1.xpose.msra.mxu0 %v1277
  %v1279 = vand.u32 %v738, 4294901760
  %1280 = vmatprep.subr.mxu0 %v1279
  %v1281 = vand.u32 %v737, 4294901760
  %1282 = vmatpush1.xpose.msra.mxu0 %v1281
  %1283 = vmatprep.subr.mxu0 0.0
  %1284 = vmatpush2.xpose.msra.mxu0 0.0
  %1285 = vmatprep.subr.mxu0 0.0
  %1286 = vmatpush2.xpose.msra.mxu0 0.0
  %1287 = vmatprep.subr.mxu0 0.0
  %1288 = vmatpush2.xpose.msra.mxu0 0.0
  %1289 = vmatprep.subr.mxu0 0.0
  %1290 = vmatpush2.xpose.msra.mxu0 0.0
  %1291 = vmatprep.subr.mxu0 0.0
  %1292 = vmatpush2.xpose.msra.mxu0 0.0
  %1293 = vmatprep.subr.mxu0 0.0
  %1294 = vmatpush2.xpose.msra.mxu0 0.0
  %1295 = vmatprep.subr.mxu0 0.0
  %1296 = vmatpush2.xpose.msra.mxu0 0.0
  %1297 = vmatprep.subr.mxu0 0.0
  %1298 = vmatpush2.xpose.msra.mxu0 0.0
  %1299 = vmatprep.subr.mxu0 0.0
  %1300 = vmatpush2.xpose.msra.mxu0 0.0
  %1301 = vmatprep.subr.mxu0 0.0
  %1302 = vmatpush2.xpose.msra.mxu0 0.0
  %1303 = vmatprep.subr.mxu0 0.0
  %1304 = vmatpush2.xpose.msra.mxu0 0.0
  %1305 = vmatprep.subr.mxu0 0.0
  %1306 = vmatpush2.xpose.msra.mxu0 0.0
  %1307 = vmatprep.subr.mxu0 0.0
  %1308 = vmatpush2.xpose.msra.mxu0 0.0
  %1309 = vmatprep.subr.mxu0 0.0
  %1310 = vmatpush2.xpose.msra.mxu0 0.0
  %1311 = vmatprep.subr.mxu0 0.0
  %1312 = vmatpush2.xpose.msra.mxu0 0.0
  %1313 = vmatprep.subr.mxu0 0.0
  %1314 = vmatpush2.xpose.msra.mxu0 0.0
  %v1315 = vand.u32 %v735, 4294901760
  %1316 = vmatprep.mubr.f32.mxu0 %v1315
  %v1317 = vand.u32 %v734, 4294901760
  %1318 = vmatmul.mubr.f32.gmra.mxu0 %v1317
  %v1319 = vpop.f32.mrf.mxu0
  %v1320 = vadd.f32 %v1238, %v1319
  %v1321 = vpop.f32.mrf.mxu0
  %1322 = vdwg.mxu0
  %v1323 = vmul.f32 %v1320, 1.442695
  %v1324 = vpow.pop %v1323
  %v1325 = vand.u32 %v722, 15
  %v1326 = vshra.s32 %v722, 4
  %v1327 = vcvt.s32.f32 %v1325
  %v1328 = vlaneseq
  %v1329 = vshrl.u32 %v1328, 7
  %v1330 = vsub.s32 0, %v1329
  %v1331 = vrot.slane %v1327, %v1330
  %1333 = vbcast.lane.b32.xlu0 %v1331, 256
  %v1334 = vpop.permute.xlu0 %1333
  %v1335 = vadd.f32 %v1334, %v1320
  %v1336 = vmul.f32 %v1335, 0.4
  %v1337 = vadd.f32 %v1336, -51.2
  %v1338 = vcvt.s32.f32 %v1326
  %v1339 = vlaneseq
  %v1340 = vshrl.u32 %v1339, 7
  %v1341 = vsub.s32 0, %v1340
  %v1342 = vrot.slane %v1338, %v1341
  %1344 = vbcast.lane.b32.xlu0 %v1342, 256
  %v1345 = vpop.permute.xlu0 %1344
  %v1346 = vadd.f32 %v1345, %v1320
  %v1347 = vmul.f32 %v1346, 0.4
  %v1348 = vadd.f32 %v1347, -51.2
  %v1349 = vsel %vm640, %v1320, -inf
  %1350 = vmax.xlane.f32.xlu0 %v1349
  %v1351 = vpop.xlane.xlu0 %1350
  %vm1352 = vcmp.eq.f32.partialorder %v1320, %v1351
  %v1353 = vsel %vm1352, %v646, 12
  %v1354 = vsel %vm640, %v1353, 2147483647
  %v1355 = vand.u32 %v1354, 65535
  %v1356 = vshra.s32 %v1354, 16
  %v1357 = vcvt.s32.f32 %v1355
  %v1358 = vcvt.s32.f32 %v1356
  %1359 = vmin.xlane.f32.xlu0 %v1358
  %v1360 = vpop.xlane.xlu0 %1359
  %vm1361 = vcmp.eq.f32.partialorder %v1358, %v1360
  %v1362 = vsel %vm1361, %v1357, inf
  %1363 = vmin.xlane.f32.xlu0 %v1362
  %v1364 = vpop.xlane.xlu0 %1363
  %v1365 = vcvt.f32.s32 %v1364
  %v1366 = vcvt.f32.s32 %v1360
  %v1367 = vshll.u32 %v1366, 16
  %v1368 = vadd.s32 %v1367, %v1365
  %vm1369 = vcmp.eq.s32.totalorder %v12, %v1368
  %1371 = vrot.lane.b32.xlu0 %v1320, 107
  %v1372 = vpop.permute.xlu0 %1371
  %v1374 = vsel %vm1369, %v1372, 0.0
  %v1375 = vsel %vm669, %v1374, 0.0
  %1376 = vadd.xlane.f32.xlu0 %v1375
  %v1377 = vpop.xlane.xlu0 %1376
  %v1378 = vmul.f32 %v1377, 0.2617994
  %v1379 = vcvt.s32.f32 %v1368
  %v1380 = vmul.f32 %v1379, 0.5235988
  %v1381 = vadd.f32 %v1380, %v1378
  %vm1382 = vcmp.gt.f32.partialorder %v1381, 3.1415927
  %v1383 = vsub.f32 %v1381, 6.2831855
  %v1384 = vsel %vm1382, %v1383, %v1381
  %v1385 = vxor.u32 %v1320, 2147483648
  %v1386 = vmul.f32 %v1385, 1.442695
  %v1387 = vpow.pop %v1386
  %v1388 = vadd.f32 %v1387, 1.0
  %v1389 = vrcp.pop %v1388
  %v1390 = vmul.f32 1.0, %v1389
  %v1391 = vsel %vm686, %v1390, -inf
  %1392 = vmax.xlane.f32.xlu0 %v1391
  %v1393 = vpop.xlane.xlu0 %1392
  %1395 = vrot.lane.b32.xlu0 %v1337, 125
  %v1396 = vpop.permute.xlu0 %1395
  %1399 = vrot.lane.b32.xlu0 %v1348, 125
  %v1400 = vpop.permute.xlu0 %1399
  %1402 = vrot.lane.b32.xlu0 %v1320, 125
  %v1403 = vpop.permute.xlu0 %1402
  %1406 = vrot.lane.b32.xlu0 %v1324, 125
  %v1407 = vpop.permute.xlu0 %1406
  %1410 = vrot.lane.b32.xlu0 %v1390, 7
  %v1411 = vpop.permute.xlu0 %1410
  %v1413 = vsel %vm709, %v1396, %v1400
  %v1414 = vsel %vm711, %v1413, %v1403
  %v1415 = vsel %vm686, %v1414, %v1407
  %v1416 = vsel %vm714, %v1415, %v1384
  %v1417 = vsel %vm716, %v1416, %v1411
  %v1418 = vsel %vm718, %v1417, %v1393
  %s1419 = scalar_lea.vmem %s2, 8
  %1420 = vst.msk [vmem:[%s1419] sm:$0xff] %vm720, %v1418
  // Predicated region
  $region10: #{centernet_box3d_decode.1} parent=0 // pred_check
    _
  $region11: #{centernet_box3d_decode.1} parent=0 // pred_check_branch
    %1422 = sbr.rel (0) target = $region13
  $region12: #{centernet_box3d_decode.1} parent=0 // pred_region
    _
  $region13: #{centernet_box3d_decode.1} parent=0 // pred_fallthru
    _
  // Predicated region
  $region14: #{centernet_box3d_decode.1} parent=0 // pred_check
    _
  $region15: #{centernet_box3d_decode.1} parent=0 // pred_check_branch
    %1424 = sbr.rel (0) target = $region17
  $region16: #{centernet_box3d_decode.1} parent=0 // pred_region
    _
  $region17: #{centernet_box3d_decode.1} parent=0 // pred_fallthru
    _

</llo_original>
